<compile_context>
chip_gen: v6e
topology: v6e:2x2x1
jax: 0.10.0
libtpu: 0.0.40
codegen_flags: <defaults>
</compile_context>

<pallas_src>
import functools

import jax
import jax.numpy as jnp
from jax.experimental import pallas as pl
from jax.experimental.pallas import tpu as pltpu

EPS = 1e-5
# Safe on v5e/v6e/v7x alike; the blocks here are tiny.
VMEM_LIMIT_BYTES = 32 * 1024 * 1024


def _pick_tile_rows(height, width):
    """Smallest row-tile TH dividing H with TH*W a multiple of 128 (lane-dense)."""
    for th in range(1, height + 1):
        if height % th == 0 and (th * width) % 128 == 0:
            return th
    return height  # whole image: a full-axis block is always a legal BlockSpec


# ---------------------------------------------------------------------------
# Pallas kernels
# ---------------------------------------------------------------------------
def _conv_kernel(cur_ref, prev_ref, next_ref, w_ref, b_ref, *rest,
                 img_w, apply_prologue):
    """3x3 'same' conv on one (batch, row-tile) block in flattened-spatial layout.

    cur/prev/next_ref: (1, C, TH*W) current / previous / next row-tile of the input
        (prev/next are border-clamped copies and get zero-gated -> zero padding).
    w_ref: (Cout, 9*C) im2col-folded weights;  b_ref: (Cout, 1) bias.
    If apply_prologue: rest = (scale_ref, shift_ref, y_ref, stats_ref) and the input
        window is first mapped through relu(x*scale + shift) (fused BN1+ReLU).
    Outputs: y_ref (1, Cout, TH*W); stats_ref (1, 1, Cout, 2) = per-channel
        (sum, sum_sq) of this tile, used for the BN fold outside.
    """
    if apply_prologue:
        scale_ref, shift_ref, y_ref, stats_ref = rest
    else:
        y_ref, stats_ref = rest

    f32 = jnp.float32
    cur = cur_ref[0].astype(f32)                   # (C, TP)
    C, TP = cur.shape
    W = img_w
    r = pl.program_id(1)
    num_r = pl.num_programs(1)

    def pro(v):                                    # fused BN+ReLU prologue (or identity)
        if apply_prologue:
            return jnp.maximum(v * scale_ref[...] + shift_ref[...], 0.0)
        return v

    cur = pro(cur)

    # Halo rows from neighbouring tiles; zero-gated at the image border so the
    # assembled window is implicitly zero padded (Conv2d padding=1 semantics).
    top_gate = (r > 0).astype(f32)
    bot_gate = (r < num_r - 1).astype(f32)
    top = pro(prev_ref[0][:, TP - W:].astype(f32)) * top_gate      # (C, W)
    bot = pro(next_ref[0][:, :W].astype(f32)) * bot_gate           # (C, W)

    zcol = jnp.zeros((C, 1), f32)
    # window[q] == padded image at flattened position (r*TP - W - 1 + q)
    window = jnp.concatenate([zcol, top, cur, bot, zcol], axis=1)  # (C, TP + 2W + 2)

    col = jax.lax.broadcasted_iota(jnp.int32, (1, TP), 1) % W
    not_first_col = (col != 0).astype(f32)         # mask for dx == -1 taps
    not_last_col = (col != W - 1).astype(f32)      # mask for dx == +1 taps

    taps = []
    for dy in (-1, 0, 1):
        for dx in (-1, 0, 1):
            k = dy * W + dx
            tap = window[:, (W + 1) + k:(W + 1) + k + TP]          # (C, TP) static slice
            if dx == -1:
                tap = tap * not_first_col
            elif dx == 1:
                tap = tap * not_last_col
            taps.append(tap)
    patches = jnp.concatenate(taps, axis=0)        # (9*C, TP)  im2col

    # One MXU matmul per tile: spatial (TP = TH*W, multiple of 128) on the N/lane axis.
    y = jax.lax.dot_general(w_ref[...].astype(f32), patches,
                            dimension_numbers=(((1,), (0,)), ((), ())),
                            preferred_element_type=jnp.float32)
    y = y + b_ref[...]                             # (Cout, TP) + (Cout, 1)

    y_ref[0] = y.astype(y_ref.dtype)
    ssum = jnp.sum(y, axis=1, keepdims=True)       # (Cout, 1)
    ssq = jnp.sum(y * y, axis=1, keepdims=True)    # (Cout, 1)
    stats_ref[0, 0, :, :] = jnp.concatenate([ssum, ssq], axis=1)


def _bn_relu_kernel(y_ref, scale_ref, shift_ref, o_ref):
    """Per-channel affine (folded BN) + ReLU on one lane-dense tile."""
    y = y_ref[0].astype(jnp.float32)               # (C, TP)
    o_ref[0] = jnp.maximum(y * scale_ref[...] + shift_ref[...], 0.0).astype(o_ref.dtype)


# ---------------------------------------------------------------------------
# pallas_call wrappers
# ---------------------------------------------------------------------------
def _conv_pass(x_flat, w2d, bias, scale=None, shift=None, *, img_w, tile_rows):
    """x_flat: (N, C, H*W) -> conv3x3 output (N, Cout, H*W) + per-tile channel stats."""
    N, C, HW = x_flat.shape
    Cout = w2d.shape[0]
    TP = tile_rows * img_w
    R = HW // TP
    fused = scale is not None

    kernel = functools.partial(_conv_kernel, img_w=img_w, apply_prologue=fused)

    in_specs = [
        pl.BlockSpec((1, C, TP), lambda n, r: (n, 0, r)),                         # cur
        pl.BlockSpec((1, C, TP), lambda n, r: (n, 0, jnp.maximum(r - 1, 0))),     # prev
        pl.BlockSpec((1, C, TP), lambda n, r: (n, 0, jnp.minimum(r + 1, R - 1))), # next
        pl.BlockSpec((Cout, 9 * C), lambda n, r: (0, 0)),                         # weights (resident)
        pl.BlockSpec((Cout, 1), lambda n, r: (0, 0)),                             # bias (resident)
    ]
    args = [x_flat, x_flat, x_flat, w2d, bias]
    if fused:
        in_specs += [pl.BlockSpec((C, 1), lambda n, r: (0, 0)),
                     pl.BlockSpec((C, 1), lambda n, r: (0, 0))]
        args += [scale, shift]

    y, stats = pl.pallas_call(
        kernel,
        out_shape=(jax.ShapeDtypeStruct((N, Cout, HW), jnp.float32),
                   jax.ShapeDtypeStruct((N, R, Cout, 2), jnp.float32)),
        grid=(N, R),
        in_specs=in_specs,
        out_specs=(pl.BlockSpec((1, Cout, TP), lambda n, r: (n, 0, r)),
                   pl.BlockSpec((1, 1, Cout, 2), lambda n, r: (n, r, 0, 0))),
        compiler_params=pltpu.CompilerParams(
            dimension_semantics=("parallel", "parallel"),
            vmem_limit_bytes=VMEM_LIMIT_BYTES),
    )(*args)
    return y, stats


def _bn_relu_pass(y, scale, shift, *, img_w, tile_rows):
    N, C, HW = y.shape
    TP = tile_rows * img_w
    R = HW // TP
    return pl.pallas_call(
        _bn_relu_kernel,
        out_shape=jax.ShapeDtypeStruct((N, C, HW), jnp.float32),
        grid=(N, R),
        in_specs=[pl.BlockSpec((1, C, TP), lambda n, r: (n, 0, r)),
                  pl.BlockSpec((C, 1), lambda n, r: (0, 0)),
                  pl.BlockSpec((C, 1), lambda n, r: (0, 0))],
        out_specs=pl.BlockSpec((1, C, TP), lambda n, r: (n, 0, r)),
        compiler_params=pltpu.CompilerParams(
            dimension_semantics=("parallel", "parallel"),
            vmem_limit_bytes=VMEM_LIMIT_BYTES),
    )(y, scale, shift)


def _fold_bn(stats, gamma, beta, count):
    """Training-mode BatchNorm2d folded to per-channel scale/shift from tile partials."""
    ssum = jnp.sum(stats[..., 0], axis=(0, 1))     # (C,)  tiny reduction, plain JAX
    ssq = jnp.sum(stats[..., 1], axis=(0, 1))      # (C,)
    mean = ssum / count
    var = ssq / count - mean * mean                # biased variance (training-mode BN)
    scale = gamma * jax.lax.rsqrt(var + EPS)
    shift = beta - mean * scale
    return (scale.reshape(-1, 1).astype(jnp.float32),
            shift.reshape(-1, 1).astype(jnp.float32))


def _fold_conv_weight(w_oihw):
    """(Cout, Cin, 3, 3) OIHW -> (Cout, 9*Cin), columns ordered (ky, kx, cin)."""
    cout, cin = w_oihw.shape[0], w_oihw.shape[1]
    return jnp.transpose(w_oihw, (0, 2, 3, 1)).reshape(cout, 9 * cin)


def double_conv(x_nchw, params):
    """DoubleConv forward. x: (N, Cin, H, W) f32 -> (N, Cout, H, W) f32 (NCHW)."""
    N, Cin, H, W = x_nchw.shape
    Cout = params["w1_2d"].shape[0]
    TH = _pick_tile_rows(H, W)
    count = N * H * W

    x_flat = x_nchw.reshape(N, Cin, H * W)         # NCHW -> (N, C, H*W): free reshape

    # Conv1 (+ per-tile per-channel stats of y1, so BN1 needs no extra HBM pass).
    y1, st1 = _conv_pass(x_flat, params["w1_2d"], params["b1"].reshape(-1, 1),
                         img_w=W, tile_rows=TH)
    s1, t1 = _fold_bn(st1, params["gamma1"], params["beta1"], count)

    # BN1+ReLU fused into Conv2 (+ stats of y2): z1 never round-trips through HBM.
    y2, st2 = _conv_pass(y1, params["w2_2d"], params["b2"].reshape(-1, 1),
                         scale=s1, shift=t1, img_w=W, tile_rows=TH)
    s2, t2 = _fold_bn(st2, params["gamma2"], params["beta2"], count)

    out = _bn_relu_pass(y2, s2, t2, img_w=W, tile_rows=TH)
    return out.reshape(N, Cout, H, W)


# ---------------------------------------------------------------------------
# Pure-JAX reference (NCHW, same math) for verification
# ---------------------------------------------------------------------------
def ref_double_conv(x_nchw, params):
    def conv(x, w_oihw, b):
        y = jax.lax.conv_general_dilated(
            x, w_oihw, window_strides=(1, 1), padding=((1, 1), (1, 1)),
            dimension_numbers=("NCHW", "OIHW", "NCHW"))
        return y + b[None, :, None, None]

    def bn_relu(x, gamma, beta):
        m = jnp.mean(x, axis=(0, 2, 3), keepdims=True)
        v = jnp.var(x, axis=(0, 2, 3), keepdims=True)
        y = (x - m) / jnp.sqrt(v + EPS)
        y = y * gamma[None, :, None, None] + beta[None, :, None, None]
        return jnp.maximum(y, 0.0)

    y1 = bn_relu(conv(x_nchw, params["w1_oihw"], params["b1"]),
                 params["gamma1"], params["beta1"])
    y2 = bn_relu(conv(y1, params["w2_oihw"], params["b2"]),
                 params["gamma2"], params["beta2"])
    return y2


# ---------------------------------------------------------------------------
if __name__ == "__main__":
    N, in_ch, out_ch, H, W = 2, 4, 8, 16, 16

    key = jax.random.PRNGKey(0)
    kx, kw1, kb1, kw2, kb2 = jax.random.split(key, 5)

    x = jax.random.normal(kx, (N, in_ch, H, W), dtype=jnp.float32)

    # Conv weights in PyTorch OIHW layout, deterministic init.
    w1_oihw = 0.1 * jax.random.normal(kw1, (out_ch, in_ch, 3, 3), dtype=jnp.float32)
    b1 = 0.1 * jax.random.normal(kb1, (out_ch,), dtype=jnp.float32)
    w2_oihw = 0.1 * jax.random.normal(kw2, (out_ch, out_ch, 3, 3), dtype=jnp.float32)
    b2 = 0.1 * jax.random.normal(kb2, (out_ch,), dtype=jnp.float32)

    params = dict(
        w1_2d=_fold_conv_weight(w1_oihw), b1=b1,
        w2_2d=_fold_conv_weight(w2_oihw), b2=b2,
        # BatchNorm2d default init: weight=1, bias=0
        gamma1=jnp.ones((out_ch,), jnp.float32), beta1=jnp.zeros((out_ch,), jnp.float32),
        gamma2=jnp.ones((out_ch,), jnp.float32), beta2=jnp.zeros((out_ch,), jnp.float32),
    )
    ref_params = dict(params, w1_oihw=w1_oihw, w2_oihw=w2_oihw)

    out = jax.block_until_ready(jax.jit(double_conv)(x, params))
    ref = jax.block_until_ready(ref_double_conv(x, ref_params))

    assert out.shape == (N, out_ch, H, W), out.shape
    max_err = float(jnp.max(jnp.abs(out - ref)))
    assert jnp.allclose(out, ref, atol=1e-4, rtol=1e-4), max_err

    print("KERNEL_OK")
</pallas_src>

<mosaic_0001>
module attributes {stable_mosaic.version = 11 : i64} {
  func.func @_conv_kernel(%arg0: i32, %arg1: i32, %arg2: memref<1x4x128xf32, #tpu.memory_space<vmem>>, %arg3: memref<1x4x128xf32, #tpu.memory_space<vmem>>, %arg4: memref<1x4x128xf32, #tpu.memory_space<vmem>>, %arg5: memref<8x36xf32, #tpu.memory_space<vmem>>, %arg6: memref<8x1xf32, #tpu.memory_space<vmem>>, %arg7: memref<1x8x128xf32, #tpu.memory_space<vmem>>, %arg8: memref<1x1x8x2xf32, #tpu.memory_space<vmem>>) attributes {dimension_semantics = [#tpu.dimension_semantics<parallel>, #tpu.dimension_semantics<parallel>], iteration_bounds = array<i64: 2, 2>, scalar_prefetch = 0 : i64, scratch_operands = 0 : i64, tpu.core_type = #tpu.core_type<tc>, window_params = [{transform_indices = @transform_0, window_bounds = array<i64: 1, 4, 128>}, {transform_indices = @transform_1, window_bounds = array<i64: 1, 4, 128>}, {transform_indices = @transform_2, window_bounds = array<i64: 1, 4, 128>}, {pipeline_mode = #tpu.pipeline_mode<synchronous>, transform_indices = @transform_3, window_bounds = array<i64: 8, 36>}, {pipeline_mode = #tpu.pipeline_mode<synchronous>, transform_indices = @transform_4, window_bounds = array<i64: 8, 1>}, {transform_indices = @transform_5, window_bounds = array<i64: 1, 8, 128>}, {transform_indices = @transform_6, window_bounds = array<i64: 1, 1, 8, 2>}]} {
    %c0 = arith.constant 0 : index
    %c0_0 = arith.constant 0 : index
    %c0_1 = arith.constant 0 : index
    %0 = vector.load %arg2[%c0, %c0_0, %c0_1] : memref<1x4x128xf32, #tpu.memory_space<vmem>>, vector<1x4x128xf32>
    %1 = vector.shape_cast %0 : vector<1x4x128xf32> to vector<4x128xf32>
    %c0_i32 = arith.constant 0 : i32
    %2 = arith.cmpi sgt, %arg1, %c0_i32 : i32
    %3 = arith.extui %2 : i1 to i32
    %4 = arith.sitofp %3 : i32 to f32
    %c1_i32 = arith.constant 1 : i32
    %5 = arith.cmpi slt, %arg1, %c1_i32 : i32
    %6 = arith.extui %5 : i1 to i32
    %7 = arith.sitofp %6 : i32 to f32
    %c0_2 = arith.constant 0 : index
    %c0_3 = arith.constant 0 : index
    %c0_4 = arith.constant 0 : index
    %8 = vector.load %arg3[%c0_2, %c0_3, %c0_4] : memref<1x4x128xf32, #tpu.memory_space<vmem>>, vector<1x4x128xf32>
    %9 = vector.shape_cast %8 : vector<1x4x128xf32> to vector<4x128xf32>
    %10 = vector.extract_strided_slice %9 {offsets = [0, 112], sizes = [4, 16], strides = [1, 1]} : vector<4x128xf32> to vector<4x16xf32>
    %11 = vector.broadcast %4 : f32 to vector<4x16xf32>
    %12 = arith.mulf %10, %11 : vector<4x16xf32>
    %c0_5 = arith.constant 0 : index
    %c0_6 = arith.constant 0 : index
    %c0_7 = arith.constant 0 : index
    %13 = vector.load %arg4[%c0_5, %c0_6, %c0_7] : memref<1x4x128xf32, #tpu.memory_space<vmem>>, vector<1x4x128xf32>
    %14 = vector.shape_cast %13 : vector<1x4x128xf32> to vector<4x128xf32>
    %15 = vector.extract_strided_slice %14 {offsets = [0, 0], sizes = [4, 16], strides = [1, 1]} : vector<4x128xf32> to vector<4x16xf32>
    %16 = vector.broadcast %7 : f32 to vector<4x16xf32>
    %17 = arith.mulf %15, %16 : vector<4x16xf32>
    %cst = arith.constant 0.000000e+00 : f32
    %18 = vector.broadcast %cst : f32 to vector<4x1xf32>
    %19 = tpu.concatenate %18, %12, %1, %17, %18 in 1 : vector<4x1xf32>, vector<4x16xf32>, vector<4x128xf32>, vector<4x16xf32>, vector<4x1xf32> -> vector<4x162xf32>
    %20 = tpu.iota {dimensions = array<i32: 1>} : vector<1x128xi32>
    %c16_i32 = arith.constant 16 : i32
    %c0_i32_8 = arith.constant 0 : i32
    %21 = arith.cmpi eq, %c16_i32, %c0_i32_8 : i32
    %c1_i32_9 = arith.constant 1 : i32
    %22 = arith.select %21, %c1_i32_9, %c16_i32 : i32
    %23 = vector.broadcast %22 : i32 to vector<1x128xi32>
    %24 = arith.remsi %20, %23 : vector<1x128xi32>
    %c0_i32_10 = arith.constant 0 : i32
    %25 = vector.broadcast %c0_i32_10 : i32 to vector<1x128xi32>
    %26 = arith.cmpi ne, %24, %25 : vector<1x128xi32>
    %c0_i32_11 = arith.constant 0 : i32
    %27 = vector.broadcast %c0_i32_11 : i32 to vector<1x128xi32>
    %28 = arith.cmpi slt, %24, %27 : vector<1x128xi32>
    %c0_i32_12 = arith.constant 0 : i32
    %29 = arith.cmpi slt, %22, %c0_i32_12 : i32
    %30 = vector.broadcast %29 : i1 to vector<1x128xi1>
    %31 = vector.broadcast %30 : vector<1x128xi1> to vector<1x128xi1>
    %32 = arith.xori %28, %31 : vector<1x128xi1>
    %33 = arith.andi %32, %26 : vector<1x128xi1>
    %34 = vector.broadcast %22 : i32 to vector<1x128xi32>
    %35 = arith.addi %24, %34 : vector<1x128xi32>
    %36 = arith.select %33, %35, %24 : vector<1x128xi1>, vector<1x128xi32>
    %c0_i32_13 = arith.constant 0 : i32
    %37 = vector.broadcast %c0_i32_13 : i32 to vector<1x128xi32>
    %38 = arith.cmpi ne, %36, %37 : vector<1x128xi32>
    %39 = arith.extui %38 : vector<1x128xi1> to vector<1x128xi32>
    %40 = arith.sitofp %39 : vector<1x128xi32> to vector<1x128xf32>
    %c15_i32 = arith.constant 15 : i32
    %41 = vector.broadcast %c15_i32 : i32 to vector<1x128xi32>
    %42 = arith.cmpi ne, %36, %41 : vector<1x128xi32>
    %43 = arith.extui %42 : vector<1x128xi1> to vector<1x128xi32>
    %44 = arith.sitofp %43 : vector<1x128xi32> to vector<1x128xf32>
    %45 = vector.extract_strided_slice %19 {offsets = [0, 0], sizes = [4, 128], strides = [1, 1]} : vector<4x162xf32> to vector<4x128xf32>
    %46 = vector.broadcast %40 : vector<1x128xf32> to vector<4x128xf32>
    %47 = arith.mulf %45, %46 : vector<4x128xf32>
    %48 = vector.extract_strided_slice %19 {offsets = [0, 1], sizes = [4, 128], strides = [1, 1]} : vector<4x162xf32> to vector<4x128xf32>
    %49 = vector.extract_strided_slice %19 {offsets = [0, 2], sizes = [4, 128], strides = [1, 1]} : vector<4x162xf32> to vector<4x128xf32>
    %50 = vector.broadcast %44 : vector<1x128xf32> to vector<4x128xf32>
    %51 = arith.mulf %49, %50 : vector<4x128xf32>
    %52 = vector.extract_strided_slice %19 {offsets = [0, 16], sizes = [4, 128], strides = [1, 1]} : vector<4x162xf32> to vector<4x128xf32>
    %53 = vector.broadcast %40 : vector<1x128xf32> to vector<4x128xf32>
    %54 = arith.mulf %52, %53 : vector<4x128xf32>
    %55 = vector.extract_strided_slice %19 {offsets = [0, 17], sizes = [4, 128], strides = [1, 1]} : vector<4x162xf32> to vector<4x128xf32>
    %56 = vector.extract_strided_slice %19 {offsets = [0, 18], sizes = [4, 128], strides = [1, 1]} : vector<4x162xf32> to vector<4x128xf32>
    %57 = vector.broadcast %44 : vector<1x128xf32> to vector<4x128xf32>
    %58 = arith.mulf %56, %57 : vector<4x128xf32>
    %59 = vector.extract_strided_slice %19 {offsets = [0, 32], sizes = [4, 128], strides = [1, 1]} : vector<4x162xf32> to vector<4x128xf32>
    %60 = vector.broadcast %40 : vector<1x128xf32> to vector<4x128xf32>
    %61 = arith.mulf %59, %60 : vector<4x128xf32>
    %62 = vector.extract_strided_slice %19 {offsets = [0, 33], sizes = [4, 128], strides = [1, 1]} : vector<4x162xf32> to vector<4x128xf32>
    %63 = vector.extract_strided_slice %19 {offsets = [0, 34], sizes = [4, 128], strides = [1, 1]} : vector<4x162xf32> to vector<4x128xf32>
    %64 = vector.broadcast %44 : vector<1x128xf32> to vector<4x128xf32>
    %65 = arith.mulf %63, %64 : vector<4x128xf32>
    %66 = tpu.concatenate %47, %48, %51, %54, %55, %58, %61, %62, %65 in 0 : vector<4x128xf32>, vector<4x128xf32>, vector<4x128xf32>, vector<4x128xf32>, vector<4x128xf32>, vector<4x128xf32>, vector<4x128xf32>, vector<4x128xf32>, vector<4x128xf32> -> vector<36x128xf32>
    %c0_14 = arith.constant 0 : index
    %c0_15 = arith.constant 0 : index
    %67 = vector.load %arg5[%c0_14, %c0_15] : memref<8x36xf32, #tpu.memory_space<vmem>>, vector<8x36xf32>
    %cst_16 = arith.constant dense<0.000000e+00> : vector<8x128xf32>
    %68 = tpu.matmul %67, %66, %cst_16 {dimension_numbers = #tpu.dot_dimension_numbers<[1], [0], [0], [1], [0, 0, 1, 1], [], []>} : vector<8x36xf32>, vector<36x128xf32>, vector<8x128xf32> -> vector<8x128xf32>
    %c0_17 = arith.constant 0 : index
    %c0_18 = arith.constant 0 : index
    %69 = vector.load %arg6[%c0_17, %c0_18] : memref<8x1xf32, #tpu.memory_space<vmem>>, vector<8x1xf32>
    %70 = vector.broadcast %69 : vector<8x1xf32> to vector<8x128xf32>
    %71 = arith.addf %68, %70 : vector<8x128xf32>
    %c0_19 = arith.constant 0 : index
    %c0_20 = arith.constant 0 : index
    %c0_21 = arith.constant 0 : index
    %72 = vector.load %arg7[%c0_19, %c0_20, %c0_21] : memref<1x8x128xf32, #tpu.memory_space<vmem>>, vector<1x8x128xf32>
    %73 = vector.shape_cast %72 : vector<1x8x128xf32> to vector<8x128xf32>
    %74 = vector.shape_cast %71 : vector<8x128xf32> to vector<1x8x128xf32>
    tpu.vector_store %arg7[%c0_19, %c0_20, %c0_21], %74 {strides = array<i32>} : memref<1x8x128xf32, #tpu.memory_space<vmem>>, vector<1x8x128xf32>,
    %cst_22 = arith.constant dense<0.000000e+00> : vector<8xf32>
    %75 = vector.multi_reduction <add>, %71, %cst_22 [1] : vector<8x128xf32> to vector<8xf32>
    %76 = vector.shape_cast %75 : vector<8xf32> to vector<8x1xf32>
    %77 = arith.mulf %71, %71 : vector<8x128xf32>
    %cst_23 = arith.constant dense<0.000000e+00> : vector<8xf32>
    %78 = vector.multi_reduction <add>, %77, %cst_23 [1] : vector<8x128xf32> to vector<8xf32>
    %79 = vector.shape_cast %78 : vector<8xf32> to vector<8x1xf32>
    %80 = tpu.concatenate %76, %79 in 1 : vector<8x1xf32>, vector<8x1xf32> -> vector<8x2xf32>
    %c0_24 = arith.constant 0 : index
    %c0_25 = arith.constant 0 : index
    %c0_26 = arith.constant 0 : index
    %c0_27 = arith.constant 0 : index
    %81 = vector.load %arg8[%c0_24, %c0_25, %c0_26, %c0_27] : memref<1x1x8x2xf32, #tpu.memory_space<vmem>>, vector<1x1x8x2xf32>
    %82 = vector.shape_cast %81 : vector<1x1x8x2xf32> to vector<8x2xf32>
    %83 = vector.shape_cast %80 : vector<8x2xf32> to vector<1x1x8x2xf32>
    tpu.vector_store %arg8[%c0_24, %c0_25, %c0_26, %c0_27], %83 {strides = array<i32>} : memref<1x1x8x2xf32, #tpu.memory_space<vmem>>, vector<1x1x8x2xf32>,
    return
  }
  func.func @transform_0(%arg0: i32, %arg1: i32) -> (i32, i32, i32) {
    %c0_i32 = arith.constant 0 : i32
    %c0_i32_0 = arith.constant 0 : i32
    return %arg0, %c0_i32, %arg1 : i32, i32, i32
  }
  func.func @transform_1(%arg0: i32, %arg1: i32) -> (i32, i32, i32) {
    %c1_i32 = arith.constant 1 : i32
    %0 = arith.subi %arg1, %c1_i32 : i32
    %c0_i32 = arith.constant 0 : i32
    %1 = arith.maxsi %0, %c0_i32 : i32
    %c0_i32_0 = arith.constant 0 : i32
    %c0_i32_1 = arith.constant 0 : i32
    return %arg0, %c0_i32_0, %1 : i32, i32, i32
  }
  func.func @transform_2(%arg0: i32, %arg1: i32) -> (i32, i32, i32) {
    %c1_i32 = arith.constant 1 : i32
    %0 = arith.addi %arg1, %c1_i32 : i32
    %c1_i32_0 = arith.constant 1 : i32
    %1 = arith.minsi %0, %c1_i32_0 : i32
    %c0_i32 = arith.constant 0 : i32
    %c0_i32_1 = arith.constant 0 : i32
    return %arg0, %c0_i32, %1 : i32, i32, i32
  }
  func.func @transform_3(%arg0: i32, %arg1: i32) -> (i32, i32) {
    %c0_i32 = arith.constant 0 : i32
    %c0_i32_0 = arith.constant 0 : i32
    %c0_i32_1 = arith.constant 0 : i32
    return %c0_i32, %c0_i32_0 : i32, i32
  }
  func.func @transform_4(%arg0: i32, %arg1: i32) -> (i32, i32) {
    %c0_i32 = arith.constant 0 : i32
    %c0_i32_0 = arith.constant 0 : i32
    %c0_i32_1 = arith.constant 0 : i32
    return %c0_i32, %c0_i32_0 : i32, i32
  }
  func.func @transform_5(%arg0: i32, %arg1: i32) -> (i32, i32, i32) {
    %c0_i32 = arith.constant 0 : i32
    %c0_i32_0 = arith.constant 0 : i32
    return %arg0, %c0_i32, %arg1 : i32, i32, i32
  }
  func.func @transform_6(%arg0: i32, %arg1: i32) -> (i32, i32, i32, i32) {
    %c0_i32 = arith.constant 0 : i32
    %c0_i32_0 = arith.constant 0 : i32
    %c0_i32_1 = arith.constant 0 : i32
    return %arg0, %arg1, %c0_i32, %c0_i32_0 : i32, i32, i32, i32
  }
}

module attributes {stable_mosaic.version = 11 : i64} {
  func.func @_bn_relu_kernel(%arg0: i32, %arg1: i32, %arg2: memref<1x8x128xf32, #tpu.memory_space<vmem>>, %arg3: memref<8x1xf32, #tpu.memory_space<vmem>>, %arg4: memref<8x1xf32, #tpu.memory_space<vmem>>, %arg5: memref<1x8x128xf32, #tpu.memory_space<vmem>>) attributes {dimension_semantics = [#tpu.dimension_semantics<parallel>, #tpu.dimension_semantics<parallel>], iteration_bounds = array<i64: 2, 2>, scalar_prefetch = 0 : i64, scratch_operands = 0 : i64, tpu.core_type = #tpu.core_type<tc>, window_params = [{transform_indices = @transform_0, window_bounds = array<i64: 1, 8, 128>}, {pipeline_mode = #tpu.pipeline_mode<synchronous>, transform_indices = @transform_1, window_bounds = array<i64: 8, 1>}, {pipeline_mode = #tpu.pipeline_mode<synchronous>, transform_indices = @transform_2, window_bounds = array<i64: 8, 1>}, {transform_indices = @transform_3, window_bounds = array<i64: 1, 8, 128>}]} {
    %c0 = arith.constant 0 : index
    %c0_0 = arith.constant 0 : index
    %c0_1 = arith.constant 0 : index
    %0 = vector.load %arg2[%c0, %c0_0, %c0_1] : memref<1x8x128xf32, #tpu.memory_space<vmem>>, vector<1x8x128xf32>
    %1 = vector.shape_cast %0 : vector<1x8x128xf32> to vector<8x128xf32>
    %c0_2 = arith.constant 0 : index
    %c0_3 = arith.constant 0 : index
    %2 = vector.load %arg3[%c0_2, %c0_3] : memref<8x1xf32, #tpu.memory_space<vmem>>, vector<8x1xf32>
    %3 = vector.broadcast %2 : vector<8x1xf32> to vector<8x128xf32>
    %4 = arith.mulf %1, %3 : vector<8x128xf32>
    %c0_4 = arith.constant 0 : index
    %c0_5 = arith.constant 0 : index
    %5 = vector.load %arg4[%c0_4, %c0_5] : memref<8x1xf32, #tpu.memory_space<vmem>>, vector<8x1xf32>
    %6 = vector.broadcast %5 : vector<8x1xf32> to vector<8x128xf32>
    %7 = arith.addf %4, %6 : vector<8x128xf32>
    %cst = arith.constant 0.000000e+00 : f32
    %8 = vector.broadcast %cst : f32 to vector<8x128xf32>
    %9 = arith.maximumf %7, %8 : vector<8x128xf32>
    %c0_6 = arith.constant 0 : index
    %c0_7 = arith.constant 0 : index
    %c0_8 = arith.constant 0 : index
    %10 = vector.load %arg5[%c0_6, %c0_7, %c0_8] : memref<1x8x128xf32, #tpu.memory_space<vmem>>, vector<1x8x128xf32>
    %11 = vector.shape_cast %10 : vector<1x8x128xf32> to vector<8x128xf32>
    %12 = vector.shape_cast %9 : vector<8x128xf32> to vector<1x8x128xf32>
    tpu.vector_store %arg5[%c0_6, %c0_7, %c0_8], %12 {strides = array<i32>} : memref<1x8x128xf32, #tpu.memory_space<vmem>>, vector<1x8x128xf32>,
    return
  }
  func.func @transform_0(%arg0: i32, %arg1: i32) -> (i32, i32, i32) {
    %c0_i32 = arith.constant 0 : i32
    %c0_i32_0 = arith.constant 0 : i32
    return %arg0, %c0_i32, %arg1 : i32, i32, i32
  }
  func.func @transform_1(%arg0: i32, %arg1: i32) -> (i32, i32) {
    %c0_i32 = arith.constant 0 : i32
    %c0_i32_0 = arith.constant 0 : i32
    %c0_i32_1 = arith.constant 0 : i32
    return %c0_i32, %c0_i32_0 : i32, i32
  }
  func.func @transform_2(%arg0: i32, %arg1: i32) -> (i32, i32) {
    %c0_i32 = arith.constant 0 : i32
    %c0_i32_0 = arith.constant 0 : i32
    %c0_i32_1 = arith.constant 0 : i32
    return %c0_i32, %c0_i32_0 : i32, i32
  }
  func.func @transform_3(%arg0: i32, %arg1: i32) -> (i32, i32, i32) {
    %c0_i32 = arith.constant 0 : i32
    %c0_i32_0 = arith.constant 0 : i32
    return %arg0, %c0_i32, %arg1 : i32, i32, i32
  }
}

module attributes {stable_mosaic.version = 11 : i64} {
  func.func @_conv_kernel(%arg0: i32, %arg1: i32, %arg2: memref<1x8x128xf32, #tpu.memory_space<vmem>>, %arg3: memref<1x8x128xf32, #tpu.memory_space<vmem>>, %arg4: memref<1x8x128xf32, #tpu.memory_space<vmem>>, %arg5: memref<8x72xf32, #tpu.memory_space<vmem>>, %arg6: memref<8x1xf32, #tpu.memory_space<vmem>>, %arg7: memref<8x1xf32, #tpu.memory_space<vmem>>, %arg8: memref<8x1xf32, #tpu.memory_space<vmem>>, %arg9: memref<1x8x128xf32, #tpu.memory_space<vmem>>, %arg10: memref<1x1x8x2xf32, #tpu.memory_space<vmem>>) attributes {dimension_semantics = [#tpu.dimension_semantics<parallel>, #tpu.dimension_semantics<parallel>], iteration_bounds = array<i64: 2, 2>, scalar_prefetch = 0 : i64, scratch_operands = 0 : i64, tpu.core_type = #tpu.core_type<tc>, window_params = [{transform_indices = @transform_0, window_bounds = array<i64: 1, 8, 128>}, {transform_indices = @transform_1, window_bounds = array<i64: 1, 8, 128>}, {transform_indices = @transform_2, window_bounds = array<i64: 1, 8, 128>}, {pipeline_mode = #tpu.pipeline_mode<synchronous>, transform_indices = @transform_3, window_bounds = array<i64: 8, 72>}, {pipeline_mode = #tpu.pipeline_mode<synchronous>, transform_indices = @transform_4, window_bounds = array<i64: 8, 1>}, {pipeline_mode = #tpu.pipeline_mode<synchronous>, transform_indices = @transform_5, window_bounds = array<i64: 8, 1>}, {pipeline_mode = #tpu.pipeline_mode<synchronous>, transform_indices = @transform_6, window_bounds = array<i64: 8, 1>}, {transform_indices = @transform_7, window_bounds = array<i64: 1, 8, 128>}, {transform_indices = @transform_8, window_bounds = array<i64: 1, 1, 8, 2>}]} {
    %c0 = arith.constant 0 : index
    %c0_0 = arith.constant 0 : index
    %c0_1 = arith.constant 0 : index
    %0 = vector.load %arg2[%c0, %c0_0, %c0_1] : memref<1x8x128xf32, #tpu.memory_space<vmem>>, vector<1x8x128xf32>
    %1 = vector.shape_cast %0 : vector<1x8x128xf32> to vector<8x128xf32>
    %c0_2 = arith.constant 0 : index
    %c0_3 = arith.constant 0 : index
    %2 = vector.load %arg7[%c0_2, %c0_3] : memref<8x1xf32, #tpu.memory_space<vmem>>, vector<8x1xf32>
    %3 = vector.broadcast %2 : vector<8x1xf32> to vector<8x128xf32>
    %4 = arith.mulf %1, %3 : vector<8x128xf32>
    %c0_4 = arith.constant 0 : index
    %c0_5 = arith.constant 0 : index
    %5 = vector.load %arg8[%c0_4, %c0_5] : memref<8x1xf32, #tpu.memory_space<vmem>>, vector<8x1xf32>
    %6 = vector.broadcast %5 : vector<8x1xf32> to vector<8x128xf32>
    %7 = arith.addf %4, %6 : vector<8x128xf32>
    %cst = arith.constant 0.000000e+00 : f32
    %8 = vector.broadcast %cst : f32 to vector<8x128xf32>
    %9 = arith.maximumf %7, %8 : vector<8x128xf32>
    %c0_i32 = arith.constant 0 : i32
    %10 = arith.cmpi sgt, %arg1, %c0_i32 : i32
    %11 = arith.extui %10 : i1 to i32
    %12 = arith.sitofp %11 : i32 to f32
    %c1_i32 = arith.constant 1 : i32
    %13 = arith.cmpi slt, %arg1, %c1_i32 : i32
    %14 = arith.extui %13 : i1 to i32
    %15 = arith.sitofp %14 : i32 to f32
    %c0_6 = arith.constant 0 : index
    %c0_7 = arith.constant 0 : index
    %c0_8 = arith.constant 0 : index
    %16 = vector.load %arg3[%c0_6, %c0_7, %c0_8] : memref<1x8x128xf32, #tpu.memory_space<vmem>>, vector<1x8x128xf32>
    %17 = vector.shape_cast %16 : vector<1x8x128xf32> to vector<8x128xf32>
    %18 = vector.extract_strided_slice %17 {offsets = [0, 112], sizes = [8, 16], strides = [1, 1]} : vector<8x128xf32> to vector<8x16xf32>
    %c0_9 = arith.constant 0 : index
    %c0_10 = arith.constant 0 : index
    %19 = vector.load %arg7[%c0_9, %c0_10] : memref<8x1xf32, #tpu.memory_space<vmem>>, vector<8x1xf32>
    %20 = vector.broadcast %19 : vector<8x1xf32> to vector<8x16xf32>
    %21 = arith.mulf %18, %20 : vector<8x16xf32>
    %c0_11 = arith.constant 0 : index
    %c0_12 = arith.constant 0 : index
    %22 = vector.load %arg8[%c0_11, %c0_12] : memref<8x1xf32, #tpu.memory_space<vmem>>, vector<8x1xf32>
    %23 = vector.broadcast %22 : vector<8x1xf32> to vector<8x16xf32>
    %24 = arith.addf %21, %23 : vector<8x16xf32>
    %cst_13 = arith.constant 0.000000e+00 : f32
    %25 = vector.broadcast %cst_13 : f32 to vector<8x16xf32>
    %26 = arith.maximumf %24, %25 : vector<8x16xf32>
    %27 = vector.broadcast %12 : f32 to vector<8x16xf32>
    %28 = arith.mulf %26, %27 : vector<8x16xf32>
    %c0_14 = arith.constant 0 : index
    %c0_15 = arith.constant 0 : index
    %c0_16 = arith.constant 0 : index
    %29 = vector.load %arg4[%c0_14, %c0_15, %c0_16] : memref<1x8x128xf32, #tpu.memory_space<vmem>>, vector<1x8x128xf32>
    %30 = vector.shape_cast %29 : vector<1x8x128xf32> to vector<8x128xf32>
    %31 = vector.extract_strided_slice %30 {offsets = [0, 0], sizes = [8, 16], strides = [1, 1]} : vector<8x128xf32> to vector<8x16xf32>
    %c0_17 = arith.constant 0 : index
    %c0_18 = arith.constant 0 : index
    %32 = vector.load %arg7[%c0_17, %c0_18] : memref<8x1xf32, #tpu.memory_space<vmem>>, vector<8x1xf32>
    %33 = vector.broadcast %32 : vector<8x1xf32> to vector<8x16xf32>
    %34 = arith.mulf %31, %33 : vector<8x16xf32>
    %c0_19 = arith.constant 0 : index
    %c0_20 = arith.constant 0 : index
    %35 = vector.load %arg8[%c0_19, %c0_20] : memref<8x1xf32, #tpu.memory_space<vmem>>, vector<8x1xf32>
    %36 = vector.broadcast %35 : vector<8x1xf32> to vector<8x16xf32>
    %37 = arith.addf %34, %36 : vector<8x16xf32>
    %cst_21 = arith.constant 0.000000e+00 : f32
    %38 = vector.broadcast %cst_21 : f32 to vector<8x16xf32>
    %39 = arith.maximumf %37, %38 : vector<8x16xf32>
    %40 = vector.broadcast %15 : f32 to vector<8x16xf32>
    %41 = arith.mulf %39, %40 : vector<8x16xf32>
    %cst_22 = arith.constant 0.000000e+00 : f32
    %42 = vector.broadcast %cst_22 : f32 to vector<8x1xf32>
    %43 = tpu.concatenate %42, %28, %9, %41, %42 in 1 : vector<8x1xf32>, vector<8x16xf32>, vector<8x128xf32>, vector<8x16xf32>, vector<8x1xf32> -> vector<8x162xf32>
    %44 = tpu.iota {dimensions = array<i32: 1>} : vector<1x128xi32>
    %c16_i32 = arith.constant 16 : i32
    %c0_i32_23 = arith.constant 0 : i32
    %45 = arith.cmpi eq, %c16_i32, %c0_i32_23 : i32
    %c1_i32_24 = arith.constant 1 : i32
    %46 = arith.select %45, %c1_i32_24, %c16_i32 : i32
    %47 = vector.broadcast %46 : i32 to vector<1x128xi32>
    %48 = arith.remsi %44, %47 : vector<1x128xi32>
    %c0_i32_25 = arith.constant 0 : i32
    %49 = vector.broadcast %c0_i32_25 : i32 to vector<1x128xi32>
    %50 = arith.cmpi ne, %48, %49 : vector<1x128xi32>
    %c0_i32_26 = arith.constant 0 : i32
    %51 = vector.broadcast %c0_i32_26 : i32 to vector<1x128xi32>
    %52 = arith.cmpi slt, %48, %51 : vector<1x128xi32>
    %c0_i32_27 = arith.constant 0 : i32
    %53 = arith.cmpi slt, %46, %c0_i32_27 : i32
    %54 = vector.broadcast %53 : i1 to vector<1x128xi1>
    %55 = vector.broadcast %54 : vector<1x128xi1> to vector<1x128xi1>
    %56 = arith.xori %52, %55 : vector<1x128xi1>
    %57 = arith.andi %56, %50 : vector<1x128xi1>
    %58 = vector.broadcast %46 : i32 to vector<1x128xi32>
    %59 = arith.addi %48, %58 : vector<1x128xi32>
    %60 = arith.select %57, %59, %48 : vector<1x128xi1>, vector<1x128xi32>
    %c0_i32_28 = arith.constant 0 : i32
    %61 = vector.broadcast %c0_i32_28 : i32 to vector<1x128xi32>
    %62 = arith.cmpi ne, %60, %61 : vector<1x128xi32>
    %63 = arith.extui %62 : vector<1x128xi1> to vector<1x128xi32>
    %64 = arith.sitofp %63 : vector<1x128xi32> to vector<1x128xf32>
    %c15_i32 = arith.constant 15 : i32
    %65 = vector.broadcast %c15_i32 : i32 to vector<1x128xi32>
    %66 = arith.cmpi ne, %60, %65 : vector<1x128xi32>
    %67 = arith.extui %66 : vector<1x128xi1> to vector<1x128xi32>
    %68 = arith.sitofp %67 : vector<1x128xi32> to vector<1x128xf32>
    %69 = vector.extract_strided_slice %43 {offsets = [0, 0], sizes = [8, 128], strides = [1, 1]} : vector<8x162xf32> to vector<8x128xf32>
    %70 = vector.broadcast %64 : vector<1x128xf32> to vector<8x128xf32>
    %71 = arith.mulf %69, %70 : vector<8x128xf32>
    %72 = vector.extract_strided_slice %43 {offsets = [0, 1], sizes = [8, 128], strides = [1, 1]} : vector<8x162xf32> to vector<8x128xf32>
    %73 = vector.extract_strided_slice %43 {offsets = [0, 2], sizes = [8, 128], strides = [1, 1]} : vector<8x162xf32> to vector<8x128xf32>
    %74 = vector.broadcast %68 : vector<1x128xf32> to vector<8x128xf32>
    %75 = arith.mulf %73, %74 : vector<8x128xf32>
    %76 = vector.extract_strided_slice %43 {offsets = [0, 16], sizes = [8, 128], strides = [1, 1]} : vector<8x162xf32> to vector<8x128xf32>
    %77 = vector.broadcast %64 : vector<1x128xf32> to vector<8x128xf32>
    %78 = arith.mulf %76, %77 : vector<8x128xf32>
    %79 = vector.extract_strided_slice %43 {offsets = [0, 17], sizes = [8, 128], strides = [1, 1]} : vector<8x162xf32> to vector<8x128xf32>
    %80 = vector.extract_strided_slice %43 {offsets = [0, 18], sizes = [8, 128], strides = [1, 1]} : vector<8x162xf32> to vector<8x128xf32>
    %81 = vector.broadcast %68 : vector<1x128xf32> to vector<8x128xf32>
    %82 = arith.mulf %80, %81 : vector<8x128xf32>
    %83 = vector.extract_strided_slice %43 {offsets = [0, 32], sizes = [8, 128], strides = [1, 1]} : vector<8x162xf32> to vector<8x128xf32>
    %84 = vector.broadcast %64 : vector<1x128xf32> to vector<8x128xf32>
    %85 = arith.mulf %83, %84 : vector<8x128xf32>
    %86 = vector.extract_strided_slice %43 {offsets = [0, 33], sizes = [8, 128], strides = [1, 1]} : vector<8x162xf32> to vector<8x128xf32>
    %87 = vector.extract_strided_slice %43 {offsets = [0, 34], sizes = [8, 128], strides = [1, 1]} : vector<8x162xf32> to vector<8x128xf32>
    %88 = vector.broadcast %68 : vector<1x128xf32> to vector<8x128xf32>
    %89 = arith.mulf %87, %88 : vector<8x128xf32>
    %90 = tpu.concatenate %71, %72, %75, %78, %79, %82, %85, %86, %89 in 0 : vector<8x128xf32>, vector<8x128xf32>, vector<8x128xf32>, vector<8x128xf32>, vector<8x128xf32>, vector<8x128xf32>, vector<8x128xf32>, vector<8x128xf32>, vector<8x128xf32> -> vector<72x128xf32>
    %c0_29 = arith.constant 0 : index
    %c0_30 = arith.constant 0 : index
    %91 = vector.load %arg5[%c0_29, %c0_30] : memref<8x72xf32, #tpu.memory_space<vmem>>, vector<8x72xf32>
    %cst_31 = arith.constant dense<0.000000e+00> : vector<8x128xf32>
    %92 = tpu.matmul %91, %90, %cst_31 {dimension_numbers = #tpu.dot_dimension_numbers<[1], [0], [0], [1], [0, 0, 1, 1], [], []>} : vector<8x72xf32>, vector<72x128xf32>, vector<8x128xf32> -> vector<8x128xf32>
    %c0_32 = arith.constant 0 : index
    %c0_33 = arith.constant 0 : index
    %93 = vector.load %arg6[%c0_32, %c0_33] : memref<8x1xf32, #tpu.memory_space<vmem>>, vector<8x1xf32>
    %94 = vector.broadcast %93 : vector<8x1xf32> to vector<8x128xf32>
    %95 = arith.addf %92, %94 : vector<8x128xf32>
    %c0_34 = arith.constant 0 : index
    %c0_35 = arith.constant 0 : index
    %c0_36 = arith.constant 0 : index
    %96 = vector.load %arg9[%c0_34, %c0_35, %c0_36] : memref<1x8x128xf32, #tpu.memory_space<vmem>>, vector<1x8x128xf32>
    %97 = vector.shape_cast %96 : vector<1x8x128xf32> to vector<8x128xf32>
    %98 = vector.shape_cast %95 : vector<8x128xf32> to vector<1x8x128xf32>
    tpu.vector_store %arg9[%c0_34, %c0_35, %c0_36], %98 {strides = array<i32>} : memref<1x8x128xf32, #tpu.memory_space<vmem>>, vector<1x8x128xf32>,
    %cst_37 = arith.constant dense<0.000000e+00> : vector<8xf32>
    %99 = vector.multi_reduction <add>, %95, %cst_37 [1] : vector<8x128xf32> to vector<8xf32>
    %100 = vector.shape_cast %99 : vector<8xf32> to vector<8x1xf32>
    %101 = arith.mulf %95, %95 : vector<8x128xf32>
    %cst_38 = arith.constant dense<0.000000e+00> : vector<8xf32>
    %102 = vector.multi_reduction <add>, %101, %cst_38 [1] : vector<8x128xf32> to vector<8xf32>
    %103 = vector.shape_cast %102 : vector<8xf32> to vector<8x1xf32>
    %104 = tpu.concatenate %100, %103 in 1 : vector<8x1xf32>, vector<8x1xf32> -> vector<8x2xf32>
    %c0_39 = arith.constant 0 : index
    %c0_40 = arith.constant 0 : index
    %c0_41 = arith.constant 0 : index
    %c0_42 = arith.constant 0 : index
    %105 = vector.load %arg10[%c0_39, %c0_40, %c0_41, %c0_42] : memref<1x1x8x2xf32, #tpu.memory_space<vmem>>, vector<1x1x8x2xf32>
    %106 = vector.shape_cast %105 : vector<1x1x8x2xf32> to vector<8x2xf32>
    %107 = vector.shape_cast %104 : vector<8x2xf32> to vector<1x1x8x2xf32>
    tpu.vector_store %arg10[%c0_39, %c0_40, %c0_41, %c0_42], %107 {strides = array<i32>} : memref<1x1x8x2xf32, #tpu.memory_space<vmem>>, vector<1x1x8x2xf32>,
    return
  }
  func.func @transform_0(%arg0: i32, %arg1: i32) -> (i32, i32, i32) {
    %c0_i32 = arith.constant 0 : i32
    %c0_i32_0 = arith.constant 0 : i32
    return %arg0, %c0_i32, %arg1 : i32, i32, i32
  }
  func.func @transform_1(%arg0: i32, %arg1: i32) -> (i32, i32, i32) {
    %c1_i32 = arith.constant 1 : i32
    %0 = arith.subi %arg1, %c1_i32 : i32
    %c0_i32 = arith.constant 0 : i32
    %1 = arith.maxsi %0, %c0_i32 : i32
    %c0_i32_0 = arith.constant 0 : i32
    %c0_i32_1 = arith.constant 0 : i32
    return %arg0, %c0_i32_0, %1 : i32, i32, i32
  }
  func.func @transform_2(%arg0: i32, %arg1: i32) -> (i32, i32, i32) {
    %c1_i32 = arith.constant 1 : i32
    %0 = arith.addi %arg1, %c1_i32 : i32
    %c1_i32_0 = arith.constant 1 : i32
    %1 = arith.minsi %0, %c1_i32_0 : i32
    %c0_i32 = arith.constant 0 : i32
    %c0_i32_1 = arith.constant 0 : i32
    return %arg0, %c0_i32, %1 : i32, i32, i32
  }
  func.func @transform_3(%arg0: i32, %arg1: i32) -> (i32, i32) {
    %c0_i32 = arith.constant 0 : i32
    %c0_i32_0 = arith.constant 0 : i32
    %c0_i32_1 = arith.constant 0 : i32
    return %c0_i32, %c0_i32_0 : i32, i32
  }
  func.func @transform_4(%arg0: i32, %arg1: i32) -> (i32, i32) {
    %c0_i32 = arith.constant 0 : i32
    %c0_i32_0 = arith.constant 0 : i32
    %c0_i32_1 = arith.constant 0 : i32
    return %c0_i32, %c0_i32_0 : i32, i32
  }
  func.func @transform_5(%arg0: i32, %arg1: i32) -> (i32, i32) {
    %c0_i32 = arith.constant 0 : i32
    %c0_i32_0 = arith.constant 0 : i32
    %c0_i32_1 = arith.constant 0 : i32
    return %c0_i32, %c0_i32_0 : i32, i32
  }
  func.func @transform_6(%arg0: i32, %arg1: i32) -> (i32, i32) {
    %c0_i32 = arith.constant 0 : i32
    %c0_i32_0 = arith.constant 0 : i32
    %c0_i32_1 = arith.constant 0 : i32
    return %c0_i32, %c0_i32_0 : i32, i32
  }
  func.func @transform_7(%arg0: i32, %arg1: i32) -> (i32, i32, i32) {
    %c0_i32 = arith.constant 0 : i32
    %c0_i32_0 = arith.constant 0 : i32
    return %arg0, %c0_i32, %arg1 : i32, i32, i32
  }
  func.func @transform_8(%arg0: i32, %arg1: i32) -> (i32, i32, i32, i32) {
    %c0_i32 = arith.constant 0 : i32
    %c0_i32_0 = arith.constant 0 : i32
    %c0_i32_1 = arith.constant 0 : i32
    return %arg0, %arg1, %c0_i32, %c0_i32_0 : i32, i32, i32, i32
  }
}

</mosaic_0001>

<llo_original>
// kernel: double_conv.5
$region0: #{double_conv.5}
  #allocation0 [shape = 'u32[]', space=smem, size = 0x4, offset = 0x4, fixed_abs, tag = 'smem constant byte address 0x4 - core index']
  #allocation1 [shape = 'u32[144,128]{1,0:T(1,128)}', space=vmem, size = 0x12000, scoped, tag = 'internal scratch']
  %s0 = inlined_call_operand.vmem [shape: f32[2,8,256], index: 0, kind: input, shape index: {}]
  %s1 = inlined_call_operand.vmem [shape: f32[8,1], index: 1, kind: input, shape index: {}]
  %s2 = inlined_call_operand.vmem [shape: f32[8,1], index: 2, kind: input, shape index: {}]
  %s3 = inlined_call_operand.vmem [shape: f32[2,8,256], index: 3, kind: output, shape index: {}]
  %s4 = sld [smem:[#allocation0]]
  $region45: #{double_conv.5} parent=0
    _
  %s6 = ssub.s32 1, %s4
  %s7 = scalar_select 0, %s6, %s4
  loop: start=0, step=1, limit=6
  $region2: #{double_conv.5} parent=0 // loop_pre_header
    _
  $region3: #{double_conv.5} parent=0 // loop_header
    %s9 = sphi 0, %s13
    %p10 = scmp.ge.s32.totalorder %s9, 6
    %s16 = sphi 0, %s28
    %s17 = sphi 0, %s24
    %s18 = sphi 0, %s16
    %s19 = sphi 0, %s17
    %s20 = sphi 0, %s18
    %s21 = sphi 0, %s19
    %s33 = sphi 0, %s35
    %s36 = sphi 0, %s33
    %s37 = sphi 0, %s36
    %s53 = sphi 0, %s37
    %s57 = sphi 0, %s57
    %s59 = sphi 0, %s57
    %s60 = sphi 0, %s59
    %s74 = sphi 0, %s60
    %s78 = sphi 0, %s78
    %s80 = sphi 0, %s78
    %s81 = sphi 0, %s80
    %s95 = sphi 0, %s81
    %s103 = sphi 0, %s105
    %s106 = sphi 0, %s103
    %s107 = sphi 0, %s106
    %s123 = sphi 0, %s107
  $region4: #{double_conv.5} parent=0 // loop_header_branch
    %12 = sbr.rel (%p10) target = $region8
  $region5: #{double_conv.5} parent=0 // loop_body
    %s14 = ssub.s32 %s9, 1
    %s15 = ssub.s32 %s9, 2
    %s22 = sadd.s32 1, %s17
    %p23 = scmp.ge.s32.totalorder %s22, 2
    %s24 = scalar_select %p23, 0, %s22
    %s25 = sadd.s32 1, %s16
    %s26 = scalar_select %p23, %s25, %s16
    %p27 = scmp.ge.s32.totalorder %s26, 2
    %s28 = scalar_select %p27, 0, %s26
    %s29 = ssub.s32 %s16, %s28
    %s30 = ssub.s32 %s17, %s24
    %s31 = sor.u32 %s29, %s30
    %p32 = scmp.eq.s32.totalorder %s31, 0
    %s34 = sadd.s32 %s33, 1
    %s35 = scalar_select %p32, %s33, %s34
    %p38 = pneg %p32
    %p39 = scmp.eq.s32.totalorder %s9, 3
    %p40 = por %p38, %p39
    %p41 = scmp.ne.s32.totalorder %s33, %s36
    %p42 = scmp.eq.s32.totalorder %s9, 0
    %p43 = por %p41, %p42
    %p44 = scmp.ne.s32.totalorder %s33, %s36
    %p45 = scmp.eq.s32.totalorder %s14, 3
    %p46 = por %p44, %p45
    %p47 = scmp.ne.s32.totalorder %s36, %s37
    %p48 = scmp.eq.s32.totalorder %s14, 0
    %p49 = por %p47, %p48
    %p50 = scmp.ne.s32.totalorder %s36, %s37
    %p51 = scmp.eq.s32.totalorder %s15, 3
    %p52 = por %p50, %p51
    %p54 = scmp.ne.s32.totalorder %s37, %s53
    %p55 = scmp.eq.s32.totalorder %s15, 0
    %p56 = por %p54, %p55
    %s58 = sadd.s32 %s57, 1
    %p61 = scmp.eq.s32.totalorder %s9, 3
    %p62 = scmp.ne.s32.totalorder %s57, %s59
    %p63 = scmp.eq.s32.totalorder %s9, 0
    %p64 = por %p62, %p63
    %p65 = scmp.ne.s32.totalorder %s57, %s59
    %p66 = scmp.eq.s32.totalorder %s14, 3
    %p67 = por %p65, %p66
    %p68 = scmp.ne.s32.totalorder %s59, %s60
    %p69 = scmp.eq.s32.totalorder %s14, 0
    %p70 = por %p68, %p69
    %p71 = scmp.ne.s32.totalorder %s59, %s60
    %p72 = scmp.eq.s32.totalorder %s15, 3
    %p73 = por %p71, %p72
    %p75 = scmp.ne.s32.totalorder %s60, %s74
    %p76 = scmp.eq.s32.totalorder %s15, 0
    %p77 = por %p75, %p76
    %s79 = sadd.s32 %s78, 1
    %p82 = scmp.eq.s32.totalorder %s9, 3
    %p83 = scmp.ne.s32.totalorder %s78, %s80
    %p84 = scmp.eq.s32.totalorder %s9, 0
    %p85 = por %p83, %p84
    %p86 = scmp.ne.s32.totalorder %s78, %s80
    %p87 = scmp.eq.s32.totalorder %s14, 3
    %p88 = por %p86, %p87
    %p89 = scmp.ne.s32.totalorder %s80, %s81
    %p90 = scmp.eq.s32.totalorder %s14, 0
    %p91 = por %p89, %p90
    %p92 = scmp.ne.s32.totalorder %s80, %s81
    %p93 = scmp.eq.s32.totalorder %s15, 3
    %p94 = por %p92, %p93
    %p96 = scmp.ne.s32.totalorder %s81, %s95
    %p97 = scmp.eq.s32.totalorder %s15, 0
    %p98 = por %p96, %p97
    %s99 = ssub.s32 %s16, %s28
    %s100 = ssub.s32 %s17, %s24
    %s101 = sor.u32 %s99, %s100
    %p102 = scmp.eq.s32.totalorder %s101, 0
    %s104 = sadd.s32 %s103, 1
    %s105 = scalar_select %p102, %s103, %s104
    %p108 = pneg %p102
    %p109 = scmp.eq.s32.totalorder %s9, 3
    %p110 = por %p108, %p109
    %p111 = scmp.ne.s32.totalorder %s103, %s106
    %p112 = scmp.eq.s32.totalorder %s9, 0
    %p113 = por %p111, %p112
    %p114 = scmp.ne.s32.totalorder %s103, %s106
    %p115 = scmp.eq.s32.totalorder %s14, 3
    %p116 = por %p114, %p115
    %p117 = scmp.ne.s32.totalorder %s106, %s107
    %p118 = scmp.eq.s32.totalorder %s14, 0
    %p119 = por %p117, %p118
    %p120 = scmp.ne.s32.totalorder %s106, %s107
    %p121 = scmp.eq.s32.totalorder %s15, 3
    %p122 = por %p120, %p121
    %p124 = scmp.ne.s32.totalorder %s107, %s123
    %p125 = scmp.eq.s32.totalorder %s15, 0
    %p126 = por %p124, %p125
    %p127 = scmp.le.s32.totalorder 1, %s9
    %p128 = scmp.lt.s32.totalorder %s9, 5
    %p129 = pnand %p127, %p128
    %p130 = pneg %p129
    // Predicated region
    $region9: #{double_conv.5} parent=5 // pred_check
      _
    $region10: #{double_conv.5} parent=5 // pred_check_branch
      %132 = sbr.rel (%p129) target = $region12
    $region11: #{double_conv.5} parent=5 // pred_region
      %s133 = ssub.s32 %s9, 1
      // Predicated region
      $region13: #{double_conv.5} parent=11 // pred_check
        %p134 = pneg %p70
      $region14: #{double_conv.5} parent=11 // pred_check_branch
        %136 = sbr.rel (%p134) target = $region16
      $region15: #{double_conv.5} parent=11 // pred_region
        _
      $region16: #{double_conv.5} parent=11 // pred_fallthru
        _
      // Predicated region
      $region17: #{double_conv.5} parent=11 // pred_check
        %p137 = pneg %p91
      $region18: #{double_conv.5} parent=11 // pred_check_branch
        %139 = sbr.rel (%p137) target = $region20
      $region19: #{double_conv.5} parent=11 // pred_region
        _
      $region20: #{double_conv.5} parent=11 // pred_fallthru
        _
    $region12: #{double_conv.5} parent=5 // pred_fallthru
      _
    %p140 = scmp.lt.s32.totalorder %s9, 4
    // Predicated region
    $region21: #{double_conv.5} parent=5 // pred_check
      %p141 = pneg %p140
    $region22: #{double_conv.5} parent=5 // pred_check_branch
      %143 = sbr.rel (%p141) target = $region24
    $region23: #{double_conv.5} parent=5 // pred_region
      // Predicated region
      $region25: #{double_conv.5} parent=23 // pred_check
        %p144 = pneg %p43
      $region26: #{double_conv.5} parent=23 // pred_check_branch
        %146 = sbr.rel (%p144) target = $region28
      $region27: #{double_conv.5} parent=23 // pred_region
        %p147 = scmp.lt.s32.totalorder %s16, 1
        %s148 = scalar_select %p147, %s16, 1
        %p149 = scmp.lt.s32.totalorder %s17, 1
        %s150 = scalar_select %p149, %s17, 1
        %s151 = smul.addr %s148, 2
        %s152 = sadd.s32 %s150, %s151
        %s153 = smul.addr %s152, 8
        %s154 = scalar_lea.vmem %s0, %s153
      $region28: #{double_conv.5} parent=23 // pred_fallthru
        _
    $region24: #{double_conv.5} parent=5 // pred_fallthru
      _
    %p155 = scmp.le.s32.totalorder 1, %s9
    %p156 = scmp.lt.s32.totalorder %s9, 5
    %p157 = pnand %p155, %p156
    %p158 = pneg %p157
    // Predicated region
    $region29: #{double_conv.5} parent=5 // pred_check
      _
    $region30: #{double_conv.5} parent=5 // pred_check_branch
      %160 = sbr.rel (%p157) target = $region32
    $region31: #{double_conv.5} parent=5 // pred_region
      %s161 = ssub.s32 %s9, 1
      %p162 = scmp.lt.s32.totalorder %s18, 1
      %s163 = scalar_select %p162, %s18, 1
      %p164 = scmp.lt.s32.totalorder %s19, 1
      %s165 = scalar_select %p164, %s19, 1
      %s166 = smul.addr %s163, 2
      %s167 = sadd.s32 %s165, %s166
      %s168 = smul.addr %s167, 8
      %s169 = scalar_lea.vmem %s0, %s168
      %p170 = pneg %p49
      %p171 = pneg %p46
      %p172 = pneg %p70
      %p173 = pneg %p67
      %p174 = pneg %p91
      %p175 = pneg %p88
      %p176 = pneg %p119
      %p177 = pneg %p116
      %p178 = scmp.lt.s32.totalorder %s18, 1
      %s179 = scalar_select %p178, %s18, 1
      %p180 = scmp.lt.s32.totalorder %s19, 1
      %s181 = scalar_select %p180, %s19, 1
      %s182 = smul.addr %s179, 2
      %s183 = sadd.s32 %s181, %s182
      %s184 = smul.addr %s183, 8
      %s185 = scalar_lea.vmem %s3, %s184
      %p186 = scmp.lt.s32.totalorder %s18, 1
      %s187 = scalar_select %p186, %s18, 1
      %p188 = scmp.lt.s32.totalorder %s19, 1
      %s189 = scalar_select %p188, %s19, 1
      %s190 = smul.addr %s187, 2
      %s191 = sadd.s32 %s189, %s190
      %s192 = smul.addr %s191, 8
      %s193 = scalar_lea.vmem %s0, %s192
      %p194 = scmp.lt.s32.totalorder %s18, 1
      %s195 = scalar_select %p194, %s18, 1
      %p196 = scmp.lt.s32.totalorder %s19, 1
      %s197 = scalar_select %p196, %s19, 1
      %s198 = smul.addr %s195, 2
      %s199 = sadd.s32 %s197, %s198
      %s200 = smul.addr %s199, 8
      %s201 = scalar_lea.vmem %s3, %s200
      %v202 = vld [vmem:[%s193] sm:$0xff]
      %v203 = vld [vmem:[%s1] sm:$0xff]
      %205 = vset.pattern.permute.xlu0 0
      %206 = vperm.xlu0 %205, %v203
      %v207 = vpop.permute.xlu0 %206
      %v209 = vmul.f32 %v202, %v207
      %v210 = vld [vmem:[%s2] sm:$0xff]
      %212 = vset.pattern.permute.xlu0 0
      %213 = vperm.xlu0 %212, %v210
      %v214 = vpop.permute.xlu0 %213
      %v216 = vadd.f32 %v209, %v214
      %v217 = vmax.f32 %v216, 0.0
      %218 = vst [vmem:[%s201] sm:$0xff] %v217
      %p219 = scmp.lt.s32.totalorder %s18, 1
      %s220 = scalar_select %p219, %s18, 1
      %p221 = scmp.lt.s32.totalorder %s19, 1
      %s222 = scalar_select %p221, %s19, 1
      %s223 = smul.addr %s220, 2
      %s224 = sadd.s32 %s222, %s223
      %s225 = smul.addr %s224, 8
      %s226 = scalar_lea.vmem %s3, %s225
      // Predicated region
      $region33: #{double_conv.5} parent=31 // pred_check
        %p227 = pneg %p116
      $region34: #{double_conv.5} parent=31 // pred_check_branch
        %229 = sbr.rel (%p227) target = $region36
      $region35: #{double_conv.5} parent=31 // pred_region
        _
      $region36: #{double_conv.5} parent=31 // pred_fallthru
        _
    $region32: #{double_conv.5} parent=5 // pred_fallthru
      _
    %p230 = scmp.le.s32.totalorder 2, %s9
    // Predicated region
    $region37: #{double_conv.5} parent=5 // pred_check
      %p231 = pneg %p230
    $region38: #{double_conv.5} parent=5 // pred_check_branch
      %233 = sbr.rel (%p231) target = $region40
    $region39: #{double_conv.5} parent=5 // pred_region
      %s234 = ssub.s32 %s9, 2
      // Predicated region
      $region41: #{double_conv.5} parent=39 // pred_check
        %p235 = pneg %p122
      $region42: #{double_conv.5} parent=39 // pred_check_branch
        %237 = sbr.rel (%p235) target = $region44
      $region43: #{double_conv.5} parent=39 // pred_region
        %p238 = scmp.lt.s32.totalorder %s20, 1
        %s239 = scalar_select %p238, %s20, 1
        %p240 = scmp.lt.s32.totalorder %s21, 1
        %s241 = scalar_select %p240, %s21, 1
        %s242 = smul.addr %s239, 2
        %s243 = sadd.s32 %s241, %s242
        %s244 = smul.addr %s243, 8
        %s245 = scalar_lea.vmem %s3, %s244
      $region44: #{double_conv.5} parent=39 // pred_fallthru
        _
    $region40: #{double_conv.5} parent=5 // pred_fallthru
      _
  $region6: #{double_conv.5} parent=0 // loop_footer
    %s13 = sadd.s32 1, %s9
  $region7: #{double_conv.5} parent=0 // loop_footer_branch
    %8 = sbr.rel target = $region3
  $region8: #{double_conv.5} parent=0 // loop_exit
    _

// kernel: double_conv.3
$region0: #{double_conv.3}
  #allocation0 [shape = 'u32[]', space=smem, size = 0x4, offset = 0x4, fixed_abs, tag = 'smem constant byte address 0x4 - core index']
  #allocation1 [shape = 'u32[144,128]{1,0:T(1,128)}', space=vmem, size = 0x12000, scoped, tag = 'internal scratch']
  %s0 = inlined_call_operand.vmem [shape: f32[2,4,256], index: 0, kind: input, shape index: {}, may-alias: {0,1,2}]
  %s1 = inlined_call_operand.vmem [shape: f32[2,4,256], index: 1, kind: input, shape index: {}, may-alias: {0,1,2}]
  %s2 = inlined_call_operand.vmem [shape: f32[2,4,256], index: 2, kind: input, shape index: {}, may-alias: {0,1,2}]
  %s3 = inlined_call_operand.vmem [shape: f32[8,36], index: 3, kind: input, shape index: {}]
  %s4 = inlined_call_operand.vmem [shape: f32[8,1], index: 4, kind: input, shape index: {}]
  %s5 = inlined_call_operand.vmem [shape: f32[2,8,256], index: 5, kind: output, shape index: {0}]
  %s6 = inlined_call_operand.vmem [shape: f32[2,2,8,2], index: 6, kind: output, shape index: {1}]
  %7 = xla_tuple %s5, %s6
  %s8 = sld [smem:[#allocation0]]
  $region61: #{double_conv.3} parent=0
    _
  %s10 = ssub.s32 1, %s8
  %s11 = scalar_select 0, %s10, %s8
  loop: start=0, step=1, limit=6
  $region2: #{double_conv.3} parent=0 // loop_pre_header
    _
  $region3: #{double_conv.3} parent=0 // loop_header
    %s13 = sphi 0, %s17
    %p14 = scmp.ge.s32.totalorder %s13, 6
    %s20 = sphi 0, %s32
    %s21 = sphi 0, %s28
    %s22 = sphi 0, %s20
    %s23 = sphi 0, %s21
    %s24 = sphi 0, %s22
    %s25 = sphi 0, %s23
    %s37 = sphi 0, %s39
    %s40 = sphi 0, %s37
    %s41 = sphi 0, %s40
    %s57 = sphi 0, %s41
    %s71 = sphi 0, %s73
    %s74 = sphi 0, %s71
    %s75 = sphi 0, %s74
    %s91 = sphi 0, %s75
    %s105 = sphi 0, %s107
    %s108 = sphi 0, %s105
    %s109 = sphi 0, %s108
    %s125 = sphi 0, %s109
    %s129 = sphi 0, %s129
    %s131 = sphi 0, %s129
    %s132 = sphi 0, %s131
    %s146 = sphi 0, %s132
    %s150 = sphi 0, %s150
    %s152 = sphi 0, %s150
    %s153 = sphi 0, %s152
    %s167 = sphi 0, %s153
    %s175 = sphi 0, %s177
    %s178 = sphi 0, %s175
    %s179 = sphi 0, %s178
    %s195 = sphi 0, %s179
    %s203 = sphi 0, %s205
    %s206 = sphi 0, %s203
    %s207 = sphi 0, %s206
    %s223 = sphi 0, %s207
  $region4: #{double_conv.3} parent=0 // loop_header_branch
    %16 = sbr.rel (%p14) target = $region8
  $region5: #{double_conv.3} parent=0 // loop_body
    %s18 = ssub.s32 %s13, 1
    %s19 = ssub.s32 %s13, 2
    %s26 = sadd.s32 1, %s21
    %p27 = scmp.ge.s32.totalorder %s26, 2
    %s28 = scalar_select %p27, 0, %s26
    %s29 = sadd.s32 1, %s20
    %s30 = scalar_select %p27, %s29, %s20
    %p31 = scmp.ge.s32.totalorder %s30, 2
    %s32 = scalar_select %p31, 0, %s30
    %s33 = ssub.s32 %s20, %s32
    %s34 = ssub.s32 %s21, %s28
    %s35 = sor.u32 %s33, %s34
    %p36 = scmp.eq.s32.totalorder %s35, 0
    %s38 = sadd.s32 %s37, 1
    %s39 = scalar_select %p36, %s37, %s38
    %p42 = pneg %p36
    %p43 = scmp.eq.s32.totalorder %s13, 3
    %p44 = por %p42, %p43
    %p45 = scmp.ne.s32.totalorder %s37, %s40
    %p46 = scmp.eq.s32.totalorder %s13, 0
    %p47 = por %p45, %p46
    %p48 = scmp.ne.s32.totalorder %s37, %s40
    %p49 = scmp.eq.s32.totalorder %s18, 3
    %p50 = por %p48, %p49
    %p51 = scmp.ne.s32.totalorder %s40, %s41
    %p52 = scmp.eq.s32.totalorder %s18, 0
    %p53 = por %p51, %p52
    %p54 = scmp.ne.s32.totalorder %s40, %s41
    %p55 = scmp.eq.s32.totalorder %s19, 3
    %p56 = por %p54, %p55
    %p58 = scmp.ne.s32.totalorder %s41, %s57
    %p59 = scmp.eq.s32.totalorder %s19, 0
    %p60 = por %p58, %p59
    %s61 = ssub.s32 %s21, 1
    %p62 = scmp.gt.s32.totalorder %s61, 0
    %s63 = scalar_select %p62, %s61, 0
    %s64 = ssub.s32 %s28, 1
    %p65 = scmp.gt.s32.totalorder %s64, 0
    %s66 = scalar_select %p65, %s64, 0
    %s67 = ssub.s32 %s20, %s32
    %s68 = ssub.s32 %s63, %s66
    %s69 = sor.u32 %s67, %s68
    %p70 = scmp.eq.s32.totalorder %s69, 0
    %s72 = sadd.s32 %s71, 1
    %s73 = scalar_select %p70, %s71, %s72
    %p76 = pneg %p70
    %p77 = scmp.eq.s32.totalorder %s13, 3
    %p78 = por %p76, %p77
    %p79 = scmp.ne.s32.totalorder %s71, %s74
    %p80 = scmp.eq.s32.totalorder %s13, 0
    %p81 = por %p79, %p80
    %p82 = scmp.ne.s32.totalorder %s71, %s74
    %p83 = scmp.eq.s32.totalorder %s18, 3
    %p84 = por %p82, %p83
    %p85 = scmp.ne.s32.totalorder %s74, %s75
    %p86 = scmp.eq.s32.totalorder %s18, 0
    %p87 = por %p85, %p86
    %p88 = scmp.ne.s32.totalorder %s74, %s75
    %p89 = scmp.eq.s32.totalorder %s19, 3
    %p90 = por %p88, %p89
    %p92 = scmp.ne.s32.totalorder %s75, %s91
    %p93 = scmp.eq.s32.totalorder %s19, 0
    %p94 = por %p92, %p93
    %s95 = sadd.s32 %s21, 1
    %p96 = scmp.lt.s32.totalorder %s95, 1
    %s97 = scalar_select %p96, %s95, 1
    %s98 = sadd.s32 %s28, 1
    %p99 = scmp.lt.s32.totalorder %s98, 1
    %s100 = scalar_select %p99, %s98, 1
    %s101 = ssub.s32 %s20, %s32
    %s102 = ssub.s32 %s97, %s100
    %s103 = sor.u32 %s101, %s102
    %p104 = scmp.eq.s32.totalorder %s103, 0
    %s106 = sadd.s32 %s105, 1
    %s107 = scalar_select %p104, %s105, %s106
    %p110 = pneg %p104
    %p111 = scmp.eq.s32.totalorder %s13, 3
    %p112 = por %p110, %p111
    %p113 = scmp.ne.s32.totalorder %s105, %s108
    %p114 = scmp.eq.s32.totalorder %s13, 0
    %p115 = por %p113, %p114
    %p116 = scmp.ne.s32.totalorder %s105, %s108
    %p117 = scmp.eq.s32.totalorder %s18, 3
    %p118 = por %p116, %p117
    %p119 = scmp.ne.s32.totalorder %s108, %s109
    %p120 = scmp.eq.s32.totalorder %s18, 0
    %p121 = por %p119, %p120
    %p122 = scmp.ne.s32.totalorder %s108, %s109
    %p123 = scmp.eq.s32.totalorder %s19, 3
    %p124 = por %p122, %p123
    %p126 = scmp.ne.s32.totalorder %s109, %s125
    %p127 = scmp.eq.s32.totalorder %s19, 0
    %p128 = por %p126, %p127
    %s130 = sadd.s32 %s129, 1
    %p133 = scmp.eq.s32.totalorder %s13, 3
    %p134 = scmp.ne.s32.totalorder %s129, %s131
    %p135 = scmp.eq.s32.totalorder %s13, 0
    %p136 = por %p134, %p135
    %p137 = scmp.ne.s32.totalorder %s129, %s131
    %p138 = scmp.eq.s32.totalorder %s18, 3
    %p139 = por %p137, %p138
    %p140 = scmp.ne.s32.totalorder %s131, %s132
    %p141 = scmp.eq.s32.totalorder %s18, 0
    %p142 = por %p140, %p141
    %p143 = scmp.ne.s32.totalorder %s131, %s132
    %p144 = scmp.eq.s32.totalorder %s19, 3
    %p145 = por %p143, %p144
    %p147 = scmp.ne.s32.totalorder %s132, %s146
    %p148 = scmp.eq.s32.totalorder %s19, 0
    %p149 = por %p147, %p148
    %s151 = sadd.s32 %s150, 1
    %p154 = scmp.eq.s32.totalorder %s13, 3
    %p155 = scmp.ne.s32.totalorder %s150, %s152
    %p156 = scmp.eq.s32.totalorder %s13, 0
    %p157 = por %p155, %p156
    %p158 = scmp.ne.s32.totalorder %s150, %s152
    %p159 = scmp.eq.s32.totalorder %s18, 3
    %p160 = por %p158, %p159
    %p161 = scmp.ne.s32.totalorder %s152, %s153
    %p162 = scmp.eq.s32.totalorder %s18, 0
    %p163 = por %p161, %p162
    %p164 = scmp.ne.s32.totalorder %s152, %s153
    %p165 = scmp.eq.s32.totalorder %s19, 3
    %p166 = por %p164, %p165
    %p168 = scmp.ne.s32.totalorder %s153, %s167
    %p169 = scmp.eq.s32.totalorder %s19, 0
    %p170 = por %p168, %p169
    %s171 = ssub.s32 %s20, %s32
    %s172 = ssub.s32 %s21, %s28
    %s173 = sor.u32 %s171, %s172
    %p174 = scmp.eq.s32.totalorder %s173, 0
    %s176 = sadd.s32 %s175, 1
    %s177 = scalar_select %p174, %s175, %s176
    %p180 = pneg %p174
    %p181 = scmp.eq.s32.totalorder %s13, 3
    %p182 = por %p180, %p181
    %p183 = scmp.ne.s32.totalorder %s175, %s178
    %p184 = scmp.eq.s32.totalorder %s13, 0
    %p185 = por %p183, %p184
    %p186 = scmp.ne.s32.totalorder %s175, %s178
    %p187 = scmp.eq.s32.totalorder %s18, 3
    %p188 = por %p186, %p187
    %p189 = scmp.ne.s32.totalorder %s178, %s179
    %p190 = scmp.eq.s32.totalorder %s18, 0
    %p191 = por %p189, %p190
    %p192 = scmp.ne.s32.totalorder %s178, %s179
    %p193 = scmp.eq.s32.totalorder %s19, 3
    %p194 = por %p192, %p193
    %p196 = scmp.ne.s32.totalorder %s179, %s195
    %p197 = scmp.eq.s32.totalorder %s19, 0
    %p198 = por %p196, %p197
    %s199 = ssub.s32 %s20, %s32
    %s200 = ssub.s32 %s21, %s28
    %s201 = sor.u32 %s199, %s200
    %p202 = scmp.eq.s32.totalorder %s201, 0
    %s204 = sadd.s32 %s203, 1
    %s205 = scalar_select %p202, %s203, %s204
    %p208 = pneg %p202
    %p209 = scmp.eq.s32.totalorder %s13, 3
    %p210 = por %p208, %p209
    %p211 = scmp.ne.s32.totalorder %s203, %s206
    %p212 = scmp.eq.s32.totalorder %s13, 0
    %p213 = por %p211, %p212
    %p214 = scmp.ne.s32.totalorder %s203, %s206
    %p215 = scmp.eq.s32.totalorder %s18, 3
    %p216 = por %p214, %p215
    %p217 = scmp.ne.s32.totalorder %s206, %s207
    %p218 = scmp.eq.s32.totalorder %s18, 0
    %p219 = por %p217, %p218
    %p220 = scmp.ne.s32.totalorder %s206, %s207
    %p221 = scmp.eq.s32.totalorder %s19, 3
    %p222 = por %p220, %p221
    %p224 = scmp.ne.s32.totalorder %s207, %s223
    %p225 = scmp.eq.s32.totalorder %s19, 0
    %p226 = por %p224, %p225
    %p227 = scmp.le.s32.totalorder 1, %s13
    %p228 = scmp.lt.s32.totalorder %s13, 5
    %p229 = pnand %p227, %p228
    %p230 = pneg %p229
    // Predicated region
    $region9: #{double_conv.3} parent=5 // pred_check
      _
    $region10: #{double_conv.3} parent=5 // pred_check_branch
      %232 = sbr.rel (%p229) target = $region12
    $region11: #{double_conv.3} parent=5 // pred_region
      %s233 = ssub.s32 %s13, 1
      // Predicated region
      $region13: #{double_conv.3} parent=11 // pred_check
        %p234 = pneg %p142
      $region14: #{double_conv.3} parent=11 // pred_check_branch
        %236 = sbr.rel (%p234) target = $region16
      $region15: #{double_conv.3} parent=11 // pred_region
        _
      $region16: #{double_conv.3} parent=11 // pred_fallthru
        _
      // Predicated region
      $region17: #{double_conv.3} parent=11 // pred_check
        %p237 = pneg %p163
      $region18: #{double_conv.3} parent=11 // pred_check_branch
        %239 = sbr.rel (%p237) target = $region20
      $region19: #{double_conv.3} parent=11 // pred_region
        _
      $region20: #{double_conv.3} parent=11 // pred_fallthru
        _
    $region12: #{double_conv.3} parent=5 // pred_fallthru
      _
    %p240 = scmp.lt.s32.totalorder %s13, 4
    // Predicated region
    $region21: #{double_conv.3} parent=5 // pred_check
      %p241 = pneg %p240
    $region22: #{double_conv.3} parent=5 // pred_check_branch
      %243 = sbr.rel (%p241) target = $region24
    $region23: #{double_conv.3} parent=5 // pred_region
      // Predicated region
      $region25: #{double_conv.3} parent=23 // pred_check
        %p244 = pneg %p47
      $region26: #{double_conv.3} parent=23 // pred_check_branch
        %246 = sbr.rel (%p244) target = $region28
      $region27: #{double_conv.3} parent=23 // pred_region
        %p247 = scmp.lt.s32.totalorder %s20, 1
        %s248 = scalar_select %p247, %s20, 1
        %p249 = scmp.lt.s32.totalorder %s21, 1
        %s250 = scalar_select %p249, %s21, 1
        %s251 = smul.addr %s248, 2
        %s252 = sadd.s32 %s250, %s251
        %s253 = smul.addr %s252, 4
        %s254 = scalar_lea.vmem %s0, %s253
      $region28: #{double_conv.3} parent=23 // pred_fallthru
        _
      // Predicated region
      $region29: #{double_conv.3} parent=23 // pred_check
        %p255 = pneg %p81
      $region30: #{double_conv.3} parent=23 // pred_check_branch
        %257 = sbr.rel (%p255) target = $region32
      $region31: #{double_conv.3} parent=23 // pred_region
        %s258 = ssub.s32 %s21, 1
        %p259 = scmp.gt.s32.totalorder %s258, 0
        %s260 = scalar_select %p259, %s258, 0
        %p261 = scmp.lt.s32.totalorder %s20, 1
        %s262 = scalar_select %p261, %s20, 1
        %p263 = scmp.lt.s32.totalorder %s260, 1
        %s264 = scalar_select %p263, %s260, 1
        %s265 = smul.addr %s262, 2
        %s266 = sadd.s32 %s264, %s265
        %s267 = smul.addr %s266, 4
        %s268 = scalar_lea.vmem %s1, %s267
        %s269 = ssub.s32 %s21, 1
        %p270 = scmp.gt.s32.totalorder %s269, 0
        %s271 = scalar_select %p270, %s269, 0
      $region32: #{double_conv.3} parent=23 // pred_fallthru
        _
      // Predicated region
      $region33: #{double_conv.3} parent=23 // pred_check
        %p272 = pneg %p115
      $region34: #{double_conv.3} parent=23 // pred_check_branch
        %274 = sbr.rel (%p272) target = $region36
      $region35: #{double_conv.3} parent=23 // pred_region
        %s275 = sadd.s32 %s21, 1
        %p276 = scmp.lt.s32.totalorder %s275, 1
        %s277 = scalar_select %p276, %s275, 1
        %p278 = scmp.lt.s32.totalorder %s20, 1
        %s279 = scalar_select %p278, %s20, 1
        %p280 = scmp.lt.s32.totalorder %s277, 1
        %s281 = scalar_select %p280, %s277, 1
        %s282 = smul.addr %s279, 2
        %s283 = sadd.s32 %s281, %s282
        %s284 = smul.addr %s283, 4
        %s285 = scalar_lea.vmem %s2, %s284
        %s286 = sadd.s32 %s21, 1
        %p287 = scmp.lt.s32.totalorder %s286, 1
        %s288 = scalar_select %p287, %s286, 1
      $region36: #{double_conv.3} parent=23 // pred_fallthru
        _
    $region24: #{double_conv.3} parent=5 // pred_fallthru
      _
    %p289 = scmp.le.s32.totalorder 1, %s13
    %p290 = scmp.lt.s32.totalorder %s13, 5
    %p291 = pnand %p289, %p290
    %p292 = pneg %p291
    // Predicated region
    $region37: #{double_conv.3} parent=5 // pred_check
      _
    $region38: #{double_conv.3} parent=5 // pred_check_branch
      %294 = sbr.rel (%p291) target = $region40
    $region39: #{double_conv.3} parent=5 // pred_region
      %s295 = ssub.s32 %s13, 1
      %p296 = scmp.lt.s32.totalorder %s22, 1
      %s297 = scalar_select %p296, %s22, 1
      %p298 = scmp.lt.s32.totalorder %s23, 1
      %s299 = scalar_select %p298, %s23, 1
      %s300 = smul.addr %s297, 2
      %s301 = sadd.s32 %s299, %s300
      %s302 = smul.addr %s301, 4
      %s303 = scalar_lea.vmem %s0, %s302
      %p304 = pneg %p53
      %p305 = pneg %p50
      %s306 = ssub.s32 %s23, 1
      %p307 = scmp.gt.s32.totalorder %s306, 0
      %s308 = scalar_select %p307, %s306, 0
      %p309 = scmp.lt.s32.totalorder %s22, 1
      %s310 = scalar_select %p309, %s22, 1
      %p311 = scmp.lt.s32.totalorder %s308, 1
      %s312 = scalar_select %p311, %s308, 1
      %s313 = smul.addr %s310, 2
      %s314 = sadd.s32 %s312, %s313
      %s315 = smul.addr %s314, 4
      %s316 = scalar_lea.vmem %s1, %s315
      %p317 = pneg %p87
      %p318 = pneg %p84
      %s319 = sadd.s32 %s23, 1
      %p320 = scmp.lt.s32.totalorder %s319, 1
      %s321 = scalar_select %p320, %s319, 1
      %p322 = scmp.lt.s32.totalorder %s22, 1
      %s323 = scalar_select %p322, %s22, 1
      %p324 = scmp.lt.s32.totalorder %s321, 1
      %s325 = scalar_select %p324, %s321, 1
      %s326 = smul.addr %s323, 2
      %s327 = sadd.s32 %s325, %s326
      %s328 = smul.addr %s327, 4
      %s329 = scalar_lea.vmem %s2, %s328
      %p330 = pneg %p121
      %p331 = pneg %p118
      %p332 = pneg %p142
      %p333 = pneg %p139
      %p334 = pneg %p163
      %p335 = pneg %p160
      %p336 = pneg %p191
      %p337 = pneg %p188
      %p338 = scmp.lt.s32.totalorder %s22, 1
      %s339 = scalar_select %p338, %s22, 1
      %p340 = scmp.lt.s32.totalorder %s23, 1
      %s341 = scalar_select %p340, %s23, 1
      %s342 = smul.addr %s339, 2
      %s343 = sadd.s32 %s341, %s342
      %s344 = smul.addr %s343, 8
      %s345 = scalar_lea.vmem %s5, %s344
      %p346 = pneg %p219
      %p347 = pneg %p216
      %p348 = scmp.lt.s32.totalorder %s22, 1
      %s349 = scalar_select %p348, %s22, 1
      %p350 = scmp.lt.s32.totalorder %s23, 1
      %s351 = scalar_select %p350, %s23, 1
      %s352 = smul.addr %s349, 2
      %s353 = sadd.s32 %s351, %s352
      %s354 = smul.addr %s353, 8
      %s355 = scalar_lea.vmem %s6, %s354
      %p356 = scmp.lt.s32.totalorder %s22, 1
      %s357 = scalar_select %p356, %s22, 1
      %p358 = scmp.lt.s32.totalorder %s23, 1
      %s359 = scalar_select %p358, %s23, 1
      %s360 = smul.addr %s357, 2
      %s361 = sadd.s32 %s359, %s360
      %s362 = smul.addr %s361, 4
      %s363 = scalar_lea.vmem %s0, %s362
      %s364 = ssub.s32 %s23, 1
      %p365 = scmp.gt.s32.totalorder %s364, 0
      %s366 = scalar_select %p365, %s364, 0
      %p367 = scmp.lt.s32.totalorder %s22, 1
      %s368 = scalar_select %p367, %s22, 1
      %p369 = scmp.lt.s32.totalorder %s366, 1
      %s370 = scalar_select %p369, %s366, 1
      %s371 = smul.addr %s368, 2
      %s372 = sadd.s32 %s370, %s371
      %s373 = smul.addr %s372, 4
      %s374 = scalar_lea.vmem %s1, %s373
      %s375 = ssub.s32 %s23, 1
      %p376 = scmp.gt.s32.totalorder %s375, 0
      %s377 = scalar_select %p376, %s375, 0
      %s378 = sadd.s32 %s23, 1
      %p379 = scmp.lt.s32.totalorder %s378, 1
      %s380 = scalar_select %p379, %s378, 1
      %p381 = scmp.lt.s32.totalorder %s22, 1
      %s382 = scalar_select %p381, %s22, 1
      %p383 = scmp.lt.s32.totalorder %s380, 1
      %s384 = scalar_select %p383, %s380, 1
      %s385 = smul.addr %s382, 2
      %s386 = sadd.s32 %s384, %s385
      %s387 = smul.addr %s386, 4
      %s388 = scalar_lea.vmem %s2, %s387
      %s389 = sadd.s32 %s23, 1
      %p390 = scmp.lt.s32.totalorder %s389, 1
      %s391 = scalar_select %p390, %s389, 1
      %p392 = scmp.lt.s32.totalorder %s22, 1
      %s393 = scalar_select %p392, %s22, 1
      %p394 = scmp.lt.s32.totalorder %s23, 1
      %s395 = scalar_select %p394, %s23, 1
      %s396 = smul.addr %s393, 2
      %s397 = sadd.s32 %s395, %s396
      %s398 = smul.addr %s397, 8
      %s399 = scalar_lea.vmem %s5, %s398
      %p400 = scmp.lt.s32.totalorder %s22, 1
      %s401 = scalar_select %p400, %s22, 1
      %p402 = scmp.lt.s32.totalorder %s23, 1
      %s403 = scalar_select %p402, %s23, 1
      %s404 = smul.addr %s401, 2
      %s405 = sadd.s32 %s403, %s404
      %s406 = smul.addr %s405, 8
      %s407 = scalar_lea.vmem %s6, %s406
      %v408 = vld [vmem:[%s363] sm:$0xf]
      %p409 = scmp.gt.s32.totalorder %s23, 0
      %s410 = scalar_select %p409, 1, 0
      %s411 = scvt.s32.f32 %s410
      %p412 = scmp.lt.s32.totalorder %s23, 1
      %s413 = scalar_select %p412, 1, 0
      %s414 = scvt.s32.f32 %s413
      %v415 = vld [vmem:[%s374] sm:$0xf]
      %v416 = vstv %s411
      %v417 = vmul.f32 %v415, %v416
      %v418 = vld [vmem:[%s388] sm:$0xf]
      %v419 = vstv %s414
      %v420 = vmul.f32 %v418, %v419
      %422 = vrot.lane.b32.xlu0 %v417, 17
      %v423 = vpop.permute.xlu0 %422
      %426 = vrot.lane.b32.xlu0 %v408, 17
      %v427 = vpop.permute.xlu0 %426
      %430 = vrot.lane.b32.xlu0 %v420, 17
      %v431 = vpop.permute.xlu0 %430
      %vm433 = vcmask 7168
      %v434 = vsel %vm433, 0.0, %v423
      %vm435 = vcmask 138240
      %v436 = vsel %vm435, %v434, %v427
      %v437 = vsel %vm435, %v427, %v431
      %vm438 = vcmask 269312
      %v439 = vsel %vm438, %v437, 0.0
      %v440 = vlaneseq
      %v441 = vand.u32 %v440, 127
      %vm442 = vcmp.lt.s32.totalorder %v441, 0
      %v443 = vsub.s32 0, %v441
      %v444 = vsel %vm442, %v443, %v441
      %v445 = vshrl.u32 %v444, 4
      %v446 = vand.u32 %v444, 15
      %v447 = vsub.s32 0, %v446
      %v448 = vsel %vm442, %v447, %v446
      %vm449 = vcmp.ne.s32.totalorder %v448, 0
      %vm450 = vcmp.lt.s32.totalorder %v448, 0
      %vm451 = vmand %vm450, %vm449
      %v452 = vadd.s32 %v448, 16
      %v453 = vsel %vm451, %v452, %v448
      %vm454 = vcmp.ne.s32.totalorder %v453, 0
      %v455 = vsel %vm454, 1, 0
      %v456 = vcvt.s32.f32 %v455
      %vm457 = vcmp.ne.s32.totalorder %v453, 15
      %v458 = vsel %vm457, 1, 0
      %v459 = vcvt.s32.f32 %v458
      %v460 = vmul.f32 %v436, %v456
      %462 = vrot.lane.b32.xlu0 %v459, 2
      %v463 = vpop.permute.xlu0 %462
      %v465 = vmul.f32 %v436, %v463
      %v466 = vmul.f32 %v439, %v463
      %468 = vrot.lane.b32.xlu0 %v456, 16
      %v469 = vpop.permute.xlu0 %468
      %v471 = vmul.f32 %v436, %v469
      %v472 = vmul.f32 %v439, %v469
      %473 = vrot.lane.b32.xlu0 %v459, 18
      %v474 = vpop.permute.xlu0 %473
      %v476 = vmul.f32 %v436, %v474
      %v477 = vmul.f32 %v439, %v474
      %478 = vrot.lane.b32.xlu0 %v456, 32
      %v479 = vpop.permute.xlu0 %478
      %v481 = vmul.f32 %v436, %v479
      %v482 = vmul.f32 %v439, %v479
      %483 = vrot.lane.b32.xlu0 %v459, 34
      %v484 = vpop.permute.xlu0 %483
      %v486 = vmul.f32 %v436, %v484
      %v487 = vmul.f32 %v439, %v484
      %v490 = vrot.slane %v436, 4
      %v491 = vrot.slane %v439, 4
      %492 = vrot.lane.b32.xlu0 %v490, 127
      %v493 = vpop.permute.xlu0 %492
      %494 = vrot.lane.b32.xlu0 %v491, 127
      %v495 = vpop.permute.xlu0 %494
      %vm496 = vcmask 1039360
      %v497 = vsel %vm496, %v493, %v495
      %501 = vrot.lane.b32.xlu0 %v465, 126
      %v502 = vpop.permute.xlu0 %501
      %503 = vrot.lane.b32.xlu0 %v466, 126
      %v504 = vpop.permute.xlu0 %503
      %vm505 = vcmask 1031168
      %v506 = vsel %vm505, %v502, %v504
      %v510 = vrot.slane %v471, 4
      %v511 = vrot.slane %v472, 4
      %512 = vrot.lane.b32.xlu0 %v510, 112
      %v513 = vpop.permute.xlu0 %512
      %514 = vrot.lane.b32.xlu0 %v511, 112
      %v515 = vpop.permute.xlu0 %514
      %vm516 = vcmask 916480
      %v517 = vsel %vm516, %v513, %v515
      %519 = vrot.lane.b32.xlu0 %v436, 111
      %v520 = vpop.permute.xlu0 %519
      %521 = vrot.lane.b32.xlu0 %v439, 111
      %v522 = vpop.permute.xlu0 %521
      %vm523 = vcmask 908288
      %v524 = vsel %vm523, %v520, %v522
      %v528 = vrot.slane %v476, 4
      %v529 = vrot.slane %v477, 4
      %530 = vrot.lane.b32.xlu0 %v528, 110
      %v531 = vpop.permute.xlu0 %530
      %532 = vrot.lane.b32.xlu0 %v529, 110
      %v533 = vpop.permute.xlu0 %532
      %vm534 = vcmask 900096
      %v535 = vsel %vm534, %v531, %v533
      %539 = vrot.lane.b32.xlu0 %v481, 96
      %v540 = vpop.permute.xlu0 %539
      %541 = vrot.lane.b32.xlu0 %v482, 96
      %v542 = vpop.permute.xlu0 %541
      %vm543 = vcmask 785408
      %v544 = vsel %vm543, %v540, %v542
      %546 = vrot.lane.b32.xlu0 %v490, 95
      %v547 = vpop.permute.xlu0 %546
      %548 = vrot.lane.b32.xlu0 %v491, 95
      %v549 = vpop.permute.xlu0 %548
      %vm550 = vcmask 777216
      %v551 = vsel %vm550, %v547, %v549
      %555 = vrot.lane.b32.xlu0 %v486, 94
      %v556 = vpop.permute.xlu0 %555
      %557 = vrot.lane.b32.xlu0 %v487, 94
      %v558 = vpop.permute.xlu0 %557
      %vm559 = vcmask 769024
      %v560 = vsel %vm559, %v556, %v558
      %vm561 = vcmask 1043456
      %v562 = vsel %vm561, %v460, %v497
      %v563 = vsel %vm561, %v506, %v517
      %v564 = vsel %vm561, %v524, %v535
      %v565 = vsel %vm561, %v544, %v551
      %v566 = vld [vmem:[%s3] sm:$0xff]
      %v567 = vld [vmem:[%s4] sm:$0xff]
      %569 = vset.pattern.permute.xlu0 0
      %570 = vperm.xlu0 %569, %v567
      %v571 = vpop.permute.xlu0 %570
      %vm573 = vcmask 293888
      %v575 = vsel %vm573, %v566, 0
      %v577 = vsel %vm561, %v560, 0
      %579 = vmatprep.subr.mxu0 0.0
      %580 = vmatpush1.msra.mxu0 0.0
      %581 = vmatprep.subr.mxu0 0.0
      %582 = vmatpush1.msra.mxu0 0.0
      %583 = vmatprep.subr.mxu0 0.0
      %584 = vmatpush1.msra.mxu0 0.0
      %585 = vmatprep.subr.mxu0 0.0
      %586 = vmatpush1.msra.mxu0 0.0
      %587 = vmatprep.subr.mxu0 0.0
      %588 = vmatpush1.msra.mxu0 0.0
      %589 = vmatprep.subr.mxu0 0.0
      %590 = vmatpush1.msra.mxu0 0.0
      %591 = vmatprep.subr.mxu0 0.0
      %592 = vmatpush1.msra.mxu0 0.0
      %593 = vmatprep.subr.mxu0 0.0
      %594 = vmatpush1.msra.mxu0 0.0
      %595 = vmatprep.subr.mxu0 0.0
      %596 = vmatpush1.msra.mxu0 0.0
      %597 = vmatprep.subr.mxu0 0.0
      %598 = vmatpush1.msra.mxu0 0.0
      %599 = vmatprep.subr.mxu0 0.0
      %600 = vmatpush1.msra.mxu0 0.0
      %601 = vmatprep.subr.mxu0 0.0
      %602 = vmatpush1.msra.mxu0 %v577
      %603 = vmatprep.subr.mxu0 0.0
      %604 = vmatpush1.msra.mxu0 %v565
      %605 = vmatprep.subr.mxu0 0.0
      %606 = vmatpush1.msra.mxu0 %v564
      %607 = vmatprep.subr.mxu0 0.0
      %608 = vmatpush1.msra.mxu0 %v563
      %609 = vmatprep.subr.mxu0 0.0
      %610 = vmatpush1.msra.mxu0 %v562
      %611 = vmatprep.subr.mxu0 0.0
      %612 = vmatpush2.msra.mxu0 0.0
      %613 = vmatprep.subr.mxu0 0.0
      %614 = vmatpush2.msra.mxu0 0.0
      %615 = vmatprep.subr.mxu0 0.0
      %616 = vmatpush2.msra.mxu0 0.0
      %617 = vmatprep.subr.mxu0 0.0
      %618 = vmatpush2.msra.mxu0 0.0
      %619 = vmatprep.subr.mxu0 0.0
      %620 = vmatpush2.msra.mxu0 0.0
      %621 = vmatprep.subr.mxu0 0.0
      %622 = vmatpush2.msra.mxu0 0.0
      %623 = vmatprep.subr.mxu0 0.0
      %624 = vmatpush2.msra.mxu0 0.0
      %625 = vmatprep.subr.mxu0 0.0
      %626 = vmatpush2.msra.mxu0 0.0
      %627 = vmatprep.subr.mxu0 0.0
      %628 = vmatpush2.msra.mxu0 0.0
      %629 = vmatprep.subr.mxu0 0.0
      %630 = vmatpush2.msra.mxu0 0.0
      %631 = vmatprep.subr.mxu0 0.0
      %632 = vmatpush2.msra.mxu0 0.0
      %633 = vmatprep.subr.mxu0 0.0
      %634 = vmatpush2.msra.mxu0 0.0
      %635 = vmatprep.subr.mxu0 0.0
      %636 = vmatpush2.msra.mxu0 0.0
      %637 = vmatprep.subr.mxu0 0.0
      %638 = vmatpush2.msra.mxu0 0.0
      %639 = vmatprep.subr.mxu0 0.0
      %640 = vmatpush2.msra.mxu0 0.0
      %641 = vmatprep.subr.mxu0 0.0
      %642 = vmatpush2.msra.mxu0 0.0
      %643 = vmatprep.mubr.f32.mxu0 0.0
      %644 = vmatmul.mubr.f32.gmra.mxu0 %v575
      %v645 = vpop.f32.mrf.mxu0
      %v646 = vadd.f32 %v571, %v645
      %v647 = vpop.f32.mrf.mxu0
      %648 = vdwg.mxu0
      %649 = vst [vmem:[%s399] sm:$0xff] %v646
      %650 = vadd.xlane.f32.xlu0 %v646
      %v651 = vpop.xlane.xlu0 %650
      %v652 = vmul.f32 %v646, %v646
      %653 = vadd.xlane.f32.xlu0 %v652
      %v654 = vpop.xlane.xlu0 %653
      %v655 = vsel %vm433, %v651, %v654
      %vm656 = vcmask 15360
      %657 = vst.msk [vmem:[%s407] sm:$0xff] %vm656, %v655
      %p658 = scmp.lt.s32.totalorder %s22, 1
      %s659 = scalar_select %p658, %s22, 1
      %p660 = scmp.lt.s32.totalorder %s23, 1
      %s661 = scalar_select %p660, %s23, 1
      %s662 = smul.addr %s659, 2
      %s663 = sadd.s32 %s661, %s662
      %s664 = smul.addr %s663, 8
      %s665 = scalar_lea.vmem %s5, %s664
      %p666 = scmp.lt.s32.totalorder %s22, 1
      %s667 = scalar_select %p666, %s22, 1
      %p668 = scmp.lt.s32.totalorder %s23, 1
      %s669 = scalar_select %p668, %s23, 1
      %s670 = smul.addr %s667, 2
      %s671 = sadd.s32 %s669, %s670
      %s672 = smul.addr %s671, 8
      %s673 = scalar_lea.vmem %s6, %s672
      // Predicated region
      $region41: #{double_conv.3} parent=39 // pred_check
        %p674 = pneg %p188
      $region42: #{double_conv.3} parent=39 // pred_check_branch
        %676 = sbr.rel (%p674) target = $region44
      $region43: #{double_conv.3} parent=39 // pred_region
        _
      $region44: #{double_conv.3} parent=39 // pred_fallthru
        _
      // Predicated region
      $region45: #{double_conv.3} parent=39 // pred_check
        %p677 = pneg %p216
      $region46: #{double_conv.3} parent=39 // pred_check_branch
        %679 = sbr.rel (%p677) target = $region48
      $region47: #{double_conv.3} parent=39 // pred_region
        _
      $region48: #{double_conv.3} parent=39 // pred_fallthru
        _
    $region40: #{double_conv.3} parent=5 // pred_fallthru
      _
    %p680 = scmp.le.s32.totalorder 2, %s13
    // Predicated region
    $region49: #{double_conv.3} parent=5 // pred_check
      %p681 = pneg %p680
    $region50: #{double_conv.3} parent=5 // pred_check_branch
      %683 = sbr.rel (%p681) target = $region52
    $region51: #{double_conv.3} parent=5 // pred_region
      %s684 = ssub.s32 %s13, 2
      // Predicated region
      $region53: #{double_conv.3} parent=51 // pred_check
        %p685 = pneg %p194
      $region54: #{double_conv.3} parent=51 // pred_check_branch
        %687 = sbr.rel (%p685) target = $region56
      $region55: #{double_conv.3} parent=51 // pred_region
        %p688 = scmp.lt.s32.totalorder %s24, 1
        %s689 = scalar_select %p688, %s24, 1
        %p690 = scmp.lt.s32.totalorder %s25, 1
        %s691 = scalar_select %p690, %s25, 1
        %s692 = smul.addr %s689, 2
        %s693 = sadd.s32 %s691, %s692
        %s694 = smul.addr %s693, 8
        %s695 = scalar_lea.vmem %s5, %s694
      $region56: #{double_conv.3} parent=51 // pred_fallthru
        _
      // Predicated region
      $region57: #{double_conv.3} parent=51 // pred_check
        %p696 = pneg %p222
      $region58: #{double_conv.3} parent=51 // pred_check_branch
        %698 = sbr.rel (%p696) target = $region60
      $region59: #{double_conv.3} parent=51 // pred_region
        %p699 = scmp.lt.s32.totalorder %s24, 1
        %s700 = scalar_select %p699, %s24, 1
        %p701 = scmp.lt.s32.totalorder %s25, 1
        %s702 = scalar_select %p701, %s25, 1
        %s703 = smul.addr %s700, 2
        %s704 = sadd.s32 %s702, %s703
        %s705 = smul.addr %s704, 8
        %s706 = scalar_lea.vmem %s6, %s705
      $region60: #{double_conv.3} parent=51 // pred_fallthru
        _
    $region52: #{double_conv.3} parent=5 // pred_fallthru
      _
  $region6: #{double_conv.3} parent=0 // loop_footer
    %s17 = sadd.s32 1, %s13
  $region7: #{double_conv.3} parent=0 // loop_footer_branch
    %12 = sbr.rel target = $region3
  $region8: #{double_conv.3} parent=0 // loop_exit
    _

// kernel: double_conv.4
$region0: #{double_conv.4}
  #allocation0 [shape = 'u32[]', space=smem, size = 0x4, offset = 0x4, fixed_abs, tag = 'smem constant byte address 0x4 - core index']
  #allocation1 [shape = 'u32[144,128]{1,0:T(1,128)}', space=vmem, size = 0x12000, scoped, tag = 'internal scratch']
  %s0 = inlined_call_operand.vmem [shape: f32[2,8,256], index: 0, kind: input, shape index: {}, may-alias: {0,1,2}]
  %s1 = inlined_call_operand.vmem [shape: f32[2,8,256], index: 1, kind: input, shape index: {}, may-alias: {0,1,2}]
  %s2 = inlined_call_operand.vmem [shape: f32[2,8,256], index: 2, kind: input, shape index: {}, may-alias: {0,1,2}]
  %s3 = inlined_call_operand.vmem [shape: f32[8,72], index: 3, kind: input, shape index: {}]
  %s4 = inlined_call_operand.vmem [shape: f32[8,1], index: 4, kind: input, shape index: {}]
  %s5 = inlined_call_operand.vmem [shape: f32[8,1], index: 5, kind: input, shape index: {}]
  %s6 = inlined_call_operand.vmem [shape: f32[8,1], index: 6, kind: input, shape index: {}]
  %s7 = inlined_call_operand.vmem [shape: f32[2,8,256], index: 7, kind: output, shape index: {0}]
  %s8 = inlined_call_operand.vmem [shape: f32[2,2,8,2], index: 8, kind: output, shape index: {1}]
  %9 = xla_tuple %s7, %s8
  %s10 = sld [smem:[#allocation0]]
  $region69: #{double_conv.4} parent=0
    _
  %s12 = ssub.s32 1, %s10
  %s13 = scalar_select 0, %s12, %s10
  loop: start=0, step=1, limit=6
  $region2: #{double_conv.4} parent=0 // loop_pre_header
    _
  $region3: #{double_conv.4} parent=0 // loop_header
    %s15 = sphi 0, %s19
    %p16 = scmp.ge.s32.totalorder %s15, 6
    %s22 = sphi 0, %s34
    %s23 = sphi 0, %s30
    %s24 = sphi 0, %s22
    %s25 = sphi 0, %s23
    %s26 = sphi 0, %s24
    %s27 = sphi 0, %s25
    %s39 = sphi 0, %s41
    %s42 = sphi 0, %s39
    %s43 = sphi 0, %s42
    %s59 = sphi 0, %s43
    %s73 = sphi 0, %s75
    %s76 = sphi 0, %s73
    %s77 = sphi 0, %s76
    %s93 = sphi 0, %s77
    %s107 = sphi 0, %s109
    %s110 = sphi 0, %s107
    %s111 = sphi 0, %s110
    %s127 = sphi 0, %s111
    %s131 = sphi 0, %s131
    %s133 = sphi 0, %s131
    %s134 = sphi 0, %s133
    %s148 = sphi 0, %s134
    %s152 = sphi 0, %s152
    %s154 = sphi 0, %s152
    %s155 = sphi 0, %s154
    %s169 = sphi 0, %s155
    %s173 = sphi 0, %s173
    %s175 = sphi 0, %s173
    %s176 = sphi 0, %s175
    %s190 = sphi 0, %s176
    %s194 = sphi 0, %s194
    %s196 = sphi 0, %s194
    %s197 = sphi 0, %s196
    %s211 = sphi 0, %s197
    %s219 = sphi 0, %s221
    %s222 = sphi 0, %s219
    %s223 = sphi 0, %s222
    %s239 = sphi 0, %s223
    %s247 = sphi 0, %s249
    %s250 = sphi 0, %s247
    %s251 = sphi 0, %s250
    %s267 = sphi 0, %s251
  $region4: #{double_conv.4} parent=0 // loop_header_branch
    %18 = sbr.rel (%p16) target = $region8
  $region5: #{double_conv.4} parent=0 // loop_body
    %s20 = ssub.s32 %s15, 1
    %s21 = ssub.s32 %s15, 2
    %s28 = sadd.s32 1, %s23
    %p29 = scmp.ge.s32.totalorder %s28, 2
    %s30 = scalar_select %p29, 0, %s28
    %s31 = sadd.s32 1, %s22
    %s32 = scalar_select %p29, %s31, %s22
    %p33 = scmp.ge.s32.totalorder %s32, 2
    %s34 = scalar_select %p33, 0, %s32
    %s35 = ssub.s32 %s22, %s34
    %s36 = ssub.s32 %s23, %s30
    %s37 = sor.u32 %s35, %s36
    %p38 = scmp.eq.s32.totalorder %s37, 0
    %s40 = sadd.s32 %s39, 1
    %s41 = scalar_select %p38, %s39, %s40
    %p44 = pneg %p38
    %p45 = scmp.eq.s32.totalorder %s15, 3
    %p46 = por %p44, %p45
    %p47 = scmp.ne.s32.totalorder %s39, %s42
    %p48 = scmp.eq.s32.totalorder %s15, 0
    %p49 = por %p47, %p48
    %p50 = scmp.ne.s32.totalorder %s39, %s42
    %p51 = scmp.eq.s32.totalorder %s20, 3
    %p52 = por %p50, %p51
    %p53 = scmp.ne.s32.totalorder %s42, %s43
    %p54 = scmp.eq.s32.totalorder %s20, 0
    %p55 = por %p53, %p54
    %p56 = scmp.ne.s32.totalorder %s42, %s43
    %p57 = scmp.eq.s32.totalorder %s21, 3
    %p58 = por %p56, %p57
    %p60 = scmp.ne.s32.totalorder %s43, %s59
    %p61 = scmp.eq.s32.totalorder %s21, 0
    %p62 = por %p60, %p61
    %s63 = ssub.s32 %s23, 1
    %p64 = scmp.gt.s32.totalorder %s63, 0
    %s65 = scalar_select %p64, %s63, 0
    %s66 = ssub.s32 %s30, 1
    %p67 = scmp.gt.s32.totalorder %s66, 0
    %s68 = scalar_select %p67, %s66, 0
    %s69 = ssub.s32 %s22, %s34
    %s70 = ssub.s32 %s65, %s68
    %s71 = sor.u32 %s69, %s70
    %p72 = scmp.eq.s32.totalorder %s71, 0
    %s74 = sadd.s32 %s73, 1
    %s75 = scalar_select %p72, %s73, %s74
    %p78 = pneg %p72
    %p79 = scmp.eq.s32.totalorder %s15, 3
    %p80 = por %p78, %p79
    %p81 = scmp.ne.s32.totalorder %s73, %s76
    %p82 = scmp.eq.s32.totalorder %s15, 0
    %p83 = por %p81, %p82
    %p84 = scmp.ne.s32.totalorder %s73, %s76
    %p85 = scmp.eq.s32.totalorder %s20, 3
    %p86 = por %p84, %p85
    %p87 = scmp.ne.s32.totalorder %s76, %s77
    %p88 = scmp.eq.s32.totalorder %s20, 0
    %p89 = por %p87, %p88
    %p90 = scmp.ne.s32.totalorder %s76, %s77
    %p91 = scmp.eq.s32.totalorder %s21, 3
    %p92 = por %p90, %p91
    %p94 = scmp.ne.s32.totalorder %s77, %s93
    %p95 = scmp.eq.s32.totalorder %s21, 0
    %p96 = por %p94, %p95
    %s97 = sadd.s32 %s23, 1
    %p98 = scmp.lt.s32.totalorder %s97, 1
    %s99 = scalar_select %p98, %s97, 1
    %s100 = sadd.s32 %s30, 1
    %p101 = scmp.lt.s32.totalorder %s100, 1
    %s102 = scalar_select %p101, %s100, 1
    %s103 = ssub.s32 %s22, %s34
    %s104 = ssub.s32 %s99, %s102
    %s105 = sor.u32 %s103, %s104
    %p106 = scmp.eq.s32.totalorder %s105, 0
    %s108 = sadd.s32 %s107, 1
    %s109 = scalar_select %p106, %s107, %s108
    %p112 = pneg %p106
    %p113 = scmp.eq.s32.totalorder %s15, 3
    %p114 = por %p112, %p113
    %p115 = scmp.ne.s32.totalorder %s107, %s110
    %p116 = scmp.eq.s32.totalorder %s15, 0
    %p117 = por %p115, %p116
    %p118 = scmp.ne.s32.totalorder %s107, %s110
    %p119 = scmp.eq.s32.totalorder %s20, 3
    %p120 = por %p118, %p119
    %p121 = scmp.ne.s32.totalorder %s110, %s111
    %p122 = scmp.eq.s32.totalorder %s20, 0
    %p123 = por %p121, %p122
    %p124 = scmp.ne.s32.totalorder %s110, %s111
    %p125 = scmp.eq.s32.totalorder %s21, 3
    %p126 = por %p124, %p125
    %p128 = scmp.ne.s32.totalorder %s111, %s127
    %p129 = scmp.eq.s32.totalorder %s21, 0
    %p130 = por %p128, %p129
    %s132 = sadd.s32 %s131, 1
    %p135 = scmp.eq.s32.totalorder %s15, 3
    %p136 = scmp.ne.s32.totalorder %s131, %s133
    %p137 = scmp.eq.s32.totalorder %s15, 0
    %p138 = por %p136, %p137
    %p139 = scmp.ne.s32.totalorder %s131, %s133
    %p140 = scmp.eq.s32.totalorder %s20, 3
    %p141 = por %p139, %p140
    %p142 = scmp.ne.s32.totalorder %s133, %s134
    %p143 = scmp.eq.s32.totalorder %s20, 0
    %p144 = por %p142, %p143
    %p145 = scmp.ne.s32.totalorder %s133, %s134
    %p146 = scmp.eq.s32.totalorder %s21, 3
    %p147 = por %p145, %p146
    %p149 = scmp.ne.s32.totalorder %s134, %s148
    %p150 = scmp.eq.s32.totalorder %s21, 0
    %p151 = por %p149, %p150
    %s153 = sadd.s32 %s152, 1
    %p156 = scmp.eq.s32.totalorder %s15, 3
    %p157 = scmp.ne.s32.totalorder %s152, %s154
    %p158 = scmp.eq.s32.totalorder %s15, 0
    %p159 = por %p157, %p158
    %p160 = scmp.ne.s32.totalorder %s152, %s154
    %p161 = scmp.eq.s32.totalorder %s20, 3
    %p162 = por %p160, %p161
    %p163 = scmp.ne.s32.totalorder %s154, %s155
    %p164 = scmp.eq.s32.totalorder %s20, 0
    %p165 = por %p163, %p164
    %p166 = scmp.ne.s32.totalorder %s154, %s155
    %p167 = scmp.eq.s32.totalorder %s21, 3
    %p168 = por %p166, %p167
    %p170 = scmp.ne.s32.totalorder %s155, %s169
    %p171 = scmp.eq.s32.totalorder %s21, 0
    %p172 = por %p170, %p171
    %s174 = sadd.s32 %s173, 1
    %p177 = scmp.eq.s32.totalorder %s15, 3
    %p178 = scmp.ne.s32.totalorder %s173, %s175
    %p179 = scmp.eq.s32.totalorder %s15, 0
    %p180 = por %p178, %p179
    %p181 = scmp.ne.s32.totalorder %s173, %s175
    %p182 = scmp.eq.s32.totalorder %s20, 3
    %p183 = por %p181, %p182
    %p184 = scmp.ne.s32.totalorder %s175, %s176
    %p185 = scmp.eq.s32.totalorder %s20, 0
    %p186 = por %p184, %p185
    %p187 = scmp.ne.s32.totalorder %s175, %s176
    %p188 = scmp.eq.s32.totalorder %s21, 3
    %p189 = por %p187, %p188
    %p191 = scmp.ne.s32.totalorder %s176, %s190
    %p192 = scmp.eq.s32.totalorder %s21, 0
    %p193 = por %p191, %p192
    %s195 = sadd.s32 %s194, 1
    %p198 = scmp.eq.s32.totalorder %s15, 3
    %p199 = scmp.ne.s32.totalorder %s194, %s196
    %p200 = scmp.eq.s32.totalorder %s15, 0
    %p201 = por %p199, %p200
    %p202 = scmp.ne.s32.totalorder %s194, %s196
    %p203 = scmp.eq.s32.totalorder %s20, 3
    %p204 = por %p202, %p203
    %p205 = scmp.ne.s32.totalorder %s196, %s197
    %p206 = scmp.eq.s32.totalorder %s20, 0
    %p207 = por %p205, %p206
    %p208 = scmp.ne.s32.totalorder %s196, %s197
    %p209 = scmp.eq.s32.totalorder %s21, 3
    %p210 = por %p208, %p209
    %p212 = scmp.ne.s32.totalorder %s197, %s211
    %p213 = scmp.eq.s32.totalorder %s21, 0
    %p214 = por %p212, %p213
    %s215 = ssub.s32 %s22, %s34
    %s216 = ssub.s32 %s23, %s30
    %s217 = sor.u32 %s215, %s216
    %p218 = scmp.eq.s32.totalorder %s217, 0
    %s220 = sadd.s32 %s219, 1
    %s221 = scalar_select %p218, %s219, %s220
    %p224 = pneg %p218
    %p225 = scmp.eq.s32.totalorder %s15, 3
    %p226 = por %p224, %p225
    %p227 = scmp.ne.s32.totalorder %s219, %s222
    %p228 = scmp.eq.s32.totalorder %s15, 0
    %p229 = por %p227, %p228
    %p230 = scmp.ne.s32.totalorder %s219, %s222
    %p231 = scmp.eq.s32.totalorder %s20, 3
    %p232 = por %p230, %p231
    %p233 = scmp.ne.s32.totalorder %s222, %s223
    %p234 = scmp.eq.s32.totalorder %s20, 0
    %p235 = por %p233, %p234
    %p236 = scmp.ne.s32.totalorder %s222, %s223
    %p237 = scmp.eq.s32.totalorder %s21, 3
    %p238 = por %p236, %p237
    %p240 = scmp.ne.s32.totalorder %s223, %s239
    %p241 = scmp.eq.s32.totalorder %s21, 0
    %p242 = por %p240, %p241
    %s243 = ssub.s32 %s22, %s34
    %s244 = ssub.s32 %s23, %s30
    %s245 = sor.u32 %s243, %s244
    %p246 = scmp.eq.s32.totalorder %s245, 0
    %s248 = sadd.s32 %s247, 1
    %s249 = scalar_select %p246, %s247, %s248
    %p252 = pneg %p246
    %p253 = scmp.eq.s32.totalorder %s15, 3
    %p254 = por %p252, %p253
    %p255 = scmp.ne.s32.totalorder %s247, %s250
    %p256 = scmp.eq.s32.totalorder %s15, 0
    %p257 = por %p255, %p256
    %p258 = scmp.ne.s32.totalorder %s247, %s250
    %p259 = scmp.eq.s32.totalorder %s20, 3
    %p260 = por %p258, %p259
    %p261 = scmp.ne.s32.totalorder %s250, %s251
    %p262 = scmp.eq.s32.totalorder %s20, 0
    %p263 = por %p261, %p262
    %p264 = scmp.ne.s32.totalorder %s250, %s251
    %p265 = scmp.eq.s32.totalorder %s21, 3
    %p266 = por %p264, %p265
    %p268 = scmp.ne.s32.totalorder %s251, %s267
    %p269 = scmp.eq.s32.totalorder %s21, 0
    %p270 = por %p268, %p269
    %p271 = scmp.le.s32.totalorder 1, %s15
    %p272 = scmp.lt.s32.totalorder %s15, 5
    %p273 = pnand %p271, %p272
    %p274 = pneg %p273
    // Predicated region
    $region9: #{double_conv.4} parent=5 // pred_check
      _
    $region10: #{double_conv.4} parent=5 // pred_check_branch
      %276 = sbr.rel (%p273) target = $region12
    $region11: #{double_conv.4} parent=5 // pred_region
      %s277 = ssub.s32 %s15, 1
      // Predicated region
      $region13: #{double_conv.4} parent=11 // pred_check
        %p278 = pneg %p144
      $region14: #{double_conv.4} parent=11 // pred_check_branch
        %280 = sbr.rel (%p278) target = $region16
      $region15: #{double_conv.4} parent=11 // pred_region
        _
      $region16: #{double_conv.4} parent=11 // pred_fallthru
        _
      // Predicated region
      $region17: #{double_conv.4} parent=11 // pred_check
        %p281 = pneg %p165
      $region18: #{double_conv.4} parent=11 // pred_check_branch
        %283 = sbr.rel (%p281) target = $region20
      $region19: #{double_conv.4} parent=11 // pred_region
        _
      $region20: #{double_conv.4} parent=11 // pred_fallthru
        _
      // Predicated region
      $region21: #{double_conv.4} parent=11 // pred_check
        %p284 = pneg %p186
      $region22: #{double_conv.4} parent=11 // pred_check_branch
        %286 = sbr.rel (%p284) target = $region24
      $region23: #{double_conv.4} parent=11 // pred_region
        _
      $region24: #{double_conv.4} parent=11 // pred_fallthru
        _
      // Predicated region
      $region25: #{double_conv.4} parent=11 // pred_check
        %p287 = pneg %p207
      $region26: #{double_conv.4} parent=11 // pred_check_branch
        %289 = sbr.rel (%p287) target = $region28
      $region27: #{double_conv.4} parent=11 // pred_region
        _
      $region28: #{double_conv.4} parent=11 // pred_fallthru
        _
    $region12: #{double_conv.4} parent=5 // pred_fallthru
      _
    %p290 = scmp.lt.s32.totalorder %s15, 4
    // Predicated region
    $region29: #{double_conv.4} parent=5 // pred_check
      %p291 = pneg %p290
    $region30: #{double_conv.4} parent=5 // pred_check_branch
      %293 = sbr.rel (%p291) target = $region32
    $region31: #{double_conv.4} parent=5 // pred_region
      // Predicated region
      $region33: #{double_conv.4} parent=31 // pred_check
        %p294 = pneg %p49
      $region34: #{double_conv.4} parent=31 // pred_check_branch
        %296 = sbr.rel (%p294) target = $region36
      $region35: #{double_conv.4} parent=31 // pred_region
        %p297 = scmp.lt.s32.totalorder %s22, 1
        %s298 = scalar_select %p297, %s22, 1
        %p299 = scmp.lt.s32.totalorder %s23, 1
        %s300 = scalar_select %p299, %s23, 1
        %s301 = smul.addr %s298, 2
        %s302 = sadd.s32 %s300, %s301
        %s303 = smul.addr %s302, 8
        %s304 = scalar_lea.vmem %s0, %s303
      $region36: #{double_conv.4} parent=31 // pred_fallthru
        _
      // Predicated region
      $region37: #{double_conv.4} parent=31 // pred_check
        %p305 = pneg %p83
      $region38: #{double_conv.4} parent=31 // pred_check_branch
        %307 = sbr.rel (%p305) target = $region40
      $region39: #{double_conv.4} parent=31 // pred_region
        %s308 = ssub.s32 %s23, 1
        %p309 = scmp.gt.s32.totalorder %s308, 0
        %s310 = scalar_select %p309, %s308, 0
        %p311 = scmp.lt.s32.totalorder %s22, 1
        %s312 = scalar_select %p311, %s22, 1
        %p313 = scmp.lt.s32.totalorder %s310, 1
        %s314 = scalar_select %p313, %s310, 1
        %s315 = smul.addr %s312, 2
        %s316 = sadd.s32 %s314, %s315
        %s317 = smul.addr %s316, 8
        %s318 = scalar_lea.vmem %s1, %s317
        %s319 = ssub.s32 %s23, 1
        %p320 = scmp.gt.s32.totalorder %s319, 0
        %s321 = scalar_select %p320, %s319, 0
      $region40: #{double_conv.4} parent=31 // pred_fallthru
        _
      // Predicated region
      $region41: #{double_conv.4} parent=31 // pred_check
        %p322 = pneg %p117
      $region42: #{double_conv.4} parent=31 // pred_check_branch
        %324 = sbr.rel (%p322) target = $region44
      $region43: #{double_conv.4} parent=31 // pred_region
        %s325 = sadd.s32 %s23, 1
        %p326 = scmp.lt.s32.totalorder %s325, 1
        %s327 = scalar_select %p326, %s325, 1
        %p328 = scmp.lt.s32.totalorder %s22, 1
        %s329 = scalar_select %p328, %s22, 1
        %p330 = scmp.lt.s32.totalorder %s327, 1
        %s331 = scalar_select %p330, %s327, 1
        %s332 = smul.addr %s329, 2
        %s333 = sadd.s32 %s331, %s332
        %s334 = smul.addr %s333, 8
        %s335 = scalar_lea.vmem %s2, %s334
        %s336 = sadd.s32 %s23, 1
        %p337 = scmp.lt.s32.totalorder %s336, 1
        %s338 = scalar_select %p337, %s336, 1
      $region44: #{double_conv.4} parent=31 // pred_fallthru
        _
    $region32: #{double_conv.4} parent=5 // pred_fallthru
      _
    %p339 = scmp.le.s32.totalorder 1, %s15
    %p340 = scmp.lt.s32.totalorder %s15, 5
    %p341 = pnand %p339, %p340
    %p342 = pneg %p341
    // Predicated region
    $region45: #{double_conv.4} parent=5 // pred_check
      _
    $region46: #{double_conv.4} parent=5 // pred_check_branch
      %344 = sbr.rel (%p341) target = $region48
    $region47: #{double_conv.4} parent=5 // pred_region
      %s345 = ssub.s32 %s15, 1
      %p346 = scmp.lt.s32.totalorder %s24, 1
      %s347 = scalar_select %p346, %s24, 1
      %p348 = scmp.lt.s32.totalorder %s25, 1
      %s349 = scalar_select %p348, %s25, 1
      %s350 = smul.addr %s347, 2
      %s351 = sadd.s32 %s349, %s350
      %s352 = smul.addr %s351, 8
      %s353 = scalar_lea.vmem %s0, %s352
      %p354 = pneg %p55
      %p355 = pneg %p52
      %s356 = ssub.s32 %s25, 1
      %p357 = scmp.gt.s32.totalorder %s356, 0
      %s358 = scalar_select %p357, %s356, 0
      %p359 = scmp.lt.s32.totalorder %s24, 1
      %s360 = scalar_select %p359, %s24, 1
      %p361 = scmp.lt.s32.totalorder %s358, 1
      %s362 = scalar_select %p361, %s358, 1
      %s363 = smul.addr %s360, 2
      %s364 = sadd.s32 %s362, %s363
      %s365 = smul.addr %s364, 8
      %s366 = scalar_lea.vmem %s1, %s365
      %p367 = pneg %p89
      %p368 = pneg %p86
      %s369 = sadd.s32 %s25, 1
      %p370 = scmp.lt.s32.totalorder %s369, 1
      %s371 = scalar_select %p370, %s369, 1
      %p372 = scmp.lt.s32.totalorder %s24, 1
      %s373 = scalar_select %p372, %s24, 1
      %p374 = scmp.lt.s32.totalorder %s371, 1
      %s375 = scalar_select %p374, %s371, 1
      %s376 = smul.addr %s373, 2
      %s377 = sadd.s32 %s375, %s376
      %s378 = smul.addr %s377, 8
      %s379 = scalar_lea.vmem %s2, %s378
      %p380 = pneg %p123
      %p381 = pneg %p120
      %p382 = pneg %p144
      %p383 = pneg %p141
      %p384 = pneg %p165
      %p385 = pneg %p162
      %p386 = pneg %p186
      %p387 = pneg %p183
      %p388 = pneg %p207
      %p389 = pneg %p204
      %p390 = pneg %p235
      %p391 = pneg %p232
      %p392 = scmp.lt.s32.totalorder %s24, 1
      %s393 = scalar_select %p392, %s24, 1
      %p394 = scmp.lt.s32.totalorder %s25, 1
      %s395 = scalar_select %p394, %s25, 1
      %s396 = smul.addr %s393, 2
      %s397 = sadd.s32 %s395, %s396
      %s398 = smul.addr %s397, 8
      %s399 = scalar_lea.vmem %s7, %s398
      %p400 = pneg %p263
      %p401 = pneg %p260
      %p402 = scmp.lt.s32.totalorder %s24, 1
      %s403 = scalar_select %p402, %s24, 1
      %p404 = scmp.lt.s32.totalorder %s25, 1
      %s405 = scalar_select %p404, %s25, 1
      %s406 = smul.addr %s403, 2
      %s407 = sadd.s32 %s405, %s406
      %s408 = smul.addr %s407, 8
      %s409 = scalar_lea.vmem %s8, %s408
      %p410 = scmp.lt.s32.totalorder %s24, 1
      %s411 = scalar_select %p410, %s24, 1
      %p412 = scmp.lt.s32.totalorder %s25, 1
      %s413 = scalar_select %p412, %s25, 1
      %s414 = smul.addr %s411, 2
      %s415 = sadd.s32 %s413, %s414
      %s416 = smul.addr %s415, 8
      %s417 = scalar_lea.vmem %s0, %s416
      %s418 = ssub.s32 %s25, 1
      %p419 = scmp.gt.s32.totalorder %s418, 0
      %s420 = scalar_select %p419, %s418, 0
      %p421 = scmp.lt.s32.totalorder %s24, 1
      %s422 = scalar_select %p421, %s24, 1
      %p423 = scmp.lt.s32.totalorder %s420, 1
      %s424 = scalar_select %p423, %s420, 1
      %s425 = smul.addr %s422, 2
      %s426 = sadd.s32 %s424, %s425
      %s427 = smul.addr %s426, 8
      %s428 = scalar_lea.vmem %s1, %s427
      %s429 = ssub.s32 %s25, 1
      %p430 = scmp.gt.s32.totalorder %s429, 0
      %s431 = scalar_select %p430, %s429, 0
      %s432 = sadd.s32 %s25, 1
      %p433 = scmp.lt.s32.totalorder %s432, 1
      %s434 = scalar_select %p433, %s432, 1
      %p435 = scmp.lt.s32.totalorder %s24, 1
      %s436 = scalar_select %p435, %s24, 1
      %p437 = scmp.lt.s32.totalorder %s434, 1
      %s438 = scalar_select %p437, %s434, 1
      %s439 = smul.addr %s436, 2
      %s440 = sadd.s32 %s438, %s439
      %s441 = smul.addr %s440, 8
      %s442 = scalar_lea.vmem %s2, %s441
      %s443 = sadd.s32 %s25, 1
      %p444 = scmp.lt.s32.totalorder %s443, 1
      %s445 = scalar_select %p444, %s443, 1
      %p446 = scmp.lt.s32.totalorder %s24, 1
      %s447 = scalar_select %p446, %s24, 1
      %p448 = scmp.lt.s32.totalorder %s25, 1
      %s449 = scalar_select %p448, %s25, 1
      %s450 = smul.addr %s447, 2
      %s451 = sadd.s32 %s449, %s450
      %s452 = smul.addr %s451, 8
      %s453 = scalar_lea.vmem %s7, %s452
      %p454 = scmp.lt.s32.totalorder %s24, 1
      %s455 = scalar_select %p454, %s24, 1
      %p456 = scmp.lt.s32.totalorder %s25, 1
      %s457 = scalar_select %p456, %s25, 1
      %s458 = smul.addr %s455, 2
      %s459 = sadd.s32 %s457, %s458
      %s460 = smul.addr %s459, 8
      %s461 = scalar_lea.vmem %s8, %s460
      %v462 = vld [vmem:[%s417] sm:$0xff]
      %v463 = vld [vmem:[%s5] sm:$0xff]
      %465 = vset.pattern.permute.xlu0 0
      %466 = vperm.xlu0 %465, %v463
      %v467 = vpop.permute.xlu0 %466
      %v469 = vmul.f32 %v462, %v467
      %v470 = vld [vmem:[%s6] sm:$0xff]
      %472 = vset.pattern.permute.xlu0 0
      %473 = vperm.xlu0 %472, %v470
      %v474 = vpop.permute.xlu0 %473
      %v476 = vadd.f32 %v469, %v474
      %v477 = vmax.f32 %v476, 0.0
      %p478 = scmp.gt.s32.totalorder %s25, 0
      %s479 = scalar_select %p478, 1, 0
      %s480 = scvt.s32.f32 %s479
      %p481 = scmp.lt.s32.totalorder %s25, 1
      %s482 = scalar_select %p481, 1, 0
      %s483 = scvt.s32.f32 %s482
      %v484 = vld [vmem:[%s428] sm:$0xff]
      %v485 = vmul.f32 %v484, %v467
      %v486 = vadd.f32 %v485, %v474
      %v487 = vmax.f32 %v486, 0.0
      %v488 = vstv %s480
      %v489 = vmul.f32 %v487, %v488
      %v490 = vld [vmem:[%s442] sm:$0xff]
      %v491 = vmul.f32 %v490, %v467
      %v492 = vadd.f32 %v491, %v474
      %v493 = vmax.f32 %v492, 0.0
      %v494 = vstv %s483
      %v495 = vmul.f32 %v493, %v494
      %497 = vrot.lane.b32.xlu0 %v489, 17
      %v498 = vpop.permute.xlu0 %497
      %501 = vrot.lane.b32.xlu0 %v477, 17
      %v502 = vpop.permute.xlu0 %501
      %505 = vrot.lane.b32.xlu0 %v495, 17
      %v506 = vpop.permute.xlu0 %505
      %vm508 = vcmask 7168
      %v509 = vsel %vm508, 0.0, %v498
      %vm510 = vcmask 138240
      %v511 = vsel %vm510, %v509, %v502
      %v512 = vsel %vm510, %v502, %v506
      %vm513 = vcmask 269312
      %v514 = vsel %vm513, %v512, 0.0
      %v515 = vlaneseq
      %v516 = vand.u32 %v515, 127
      %vm517 = vcmp.lt.s32.totalorder %v516, 0
      %v518 = vsub.s32 0, %v516
      %v519 = vsel %vm517, %v518, %v516
      %v520 = vshrl.u32 %v519, 4
      %v521 = vand.u32 %v519, 15
      %v522 = vsub.s32 0, %v521
      %v523 = vsel %vm517, %v522, %v521
      %vm524 = vcmp.ne.s32.totalorder %v523, 0
      %vm525 = vcmp.lt.s32.totalorder %v523, 0
      %vm526 = vmand %vm525, %vm524
      %v527 = vadd.s32 %v523, 16
      %v528 = vsel %vm526, %v527, %v523
      %vm529 = vcmp.ne.s32.totalorder %v528, 0
      %v530 = vsel %vm529, 1, 0
      %v531 = vcvt.s32.f32 %v530
      %vm532 = vcmp.ne.s32.totalorder %v528, 15
      %v533 = vsel %vm532, 1, 0
      %v534 = vcvt.s32.f32 %v533
      %v535 = vmul.f32 %v511, %v531
      %537 = vrot.lane.b32.xlu0 %v534, 2
      %v538 = vpop.permute.xlu0 %537
      %v540 = vmul.f32 %v511, %v538
      %v541 = vmul.f32 %v514, %v538
      %543 = vrot.lane.b32.xlu0 %v531, 16
      %v544 = vpop.permute.xlu0 %543
      %v546 = vmul.f32 %v511, %v544
      %v547 = vmul.f32 %v514, %v544
      %548 = vrot.lane.b32.xlu0 %v534, 18
      %v549 = vpop.permute.xlu0 %548
      %v551 = vmul.f32 %v511, %v549
      %v552 = vmul.f32 %v514, %v549
      %553 = vrot.lane.b32.xlu0 %v531, 32
      %v554 = vpop.permute.xlu0 %553
      %v556 = vmul.f32 %v511, %v554
      %v557 = vmul.f32 %v514, %v554
      %558 = vrot.lane.b32.xlu0 %v534, 34
      %v559 = vpop.permute.xlu0 %558
      %v561 = vmul.f32 %v511, %v559
      %v562 = vmul.f32 %v514, %v559
      %565 = vrot.lane.b32.xlu0 %v511, 127
      %v566 = vpop.permute.xlu0 %565
      %567 = vrot.lane.b32.xlu0 %v514, 127
      %v568 = vpop.permute.xlu0 %567
      %vm569 = vcmask 1039360
      %v570 = vsel %vm569, %v566, %v568
      %574 = vrot.lane.b32.xlu0 %v540, 126
      %v575 = vpop.permute.xlu0 %574
      %576 = vrot.lane.b32.xlu0 %v541, 126
      %v577 = vpop.permute.xlu0 %576
      %vm578 = vcmask 1031168
      %v579 = vsel %vm578, %v575, %v577
      %583 = vrot.lane.b32.xlu0 %v546, 112
      %v584 = vpop.permute.xlu0 %583
      %585 = vrot.lane.b32.xlu0 %v547, 112
      %v586 = vpop.permute.xlu0 %585
      %vm587 = vcmask 916480
      %v588 = vsel %vm587, %v584, %v586
      %590 = vrot.lane.b32.xlu0 %v511, 111
      %v591 = vpop.permute.xlu0 %590
      %592 = vrot.lane.b32.xlu0 %v514, 111
      %v593 = vpop.permute.xlu0 %592
      %vm594 = vcmask 908288
      %v595 = vsel %vm594, %v591, %v593
      %599 = vrot.lane.b32.xlu0 %v551, 110
      %v600 = vpop.permute.xlu0 %599
      %601 = vrot.lane.b32.xlu0 %v552, 110
      %v602 = vpop.permute.xlu0 %601
      %vm603 = vcmask 900096
      %v604 = vsel %vm603, %v600, %v602
      %608 = vrot.lane.b32.xlu0 %v556, 96
      %v609 = vpop.permute.xlu0 %608
      %610 = vrot.lane.b32.xlu0 %v557, 96
      %v611 = vpop.permute.xlu0 %610
      %vm612 = vcmask 785408
      %v613 = vsel %vm612, %v609, %v611
      %615 = vrot.lane.b32.xlu0 %v511, 95
      %v616 = vpop.permute.xlu0 %615
      %617 = vrot.lane.b32.xlu0 %v514, 95
      %v618 = vpop.permute.xlu0 %617
      %vm619 = vcmask 777216
      %v620 = vsel %vm619, %v616, %v618
      %624 = vrot.lane.b32.xlu0 %v561, 94
      %v625 = vpop.permute.xlu0 %624
      %626 = vrot.lane.b32.xlu0 %v562, 94
      %v627 = vpop.permute.xlu0 %626
      %vm628 = vcmask 769024
      %v629 = vsel %vm628, %v625, %v627
      %v631 = vld [vmem:[%s3] sm:$0xff]
      %v632 = vld [vmem:[%s4] sm:$0xff]
      %634 = vset.pattern.permute.xlu0 0
      %635 = vperm.xlu0 %634, %v632
      %v636 = vpop.permute.xlu0 %635
      %vm638 = vcmask 588800
      %v640 = vsel %vm638, %v631, 0
      %642 = vmatprep.subr.mxu0 0.0
      %643 = vmatpush1.msra.mxu0 0.0
      %644 = vmatprep.subr.mxu0 0.0
      %645 = vmatpush1.msra.mxu0 0.0
      %646 = vmatprep.subr.mxu0 0.0
      %647 = vmatpush1.msra.mxu0 0.0
      %648 = vmatprep.subr.mxu0 0.0
      %649 = vmatpush1.msra.mxu0 0.0
      %650 = vmatprep.subr.mxu0 0.0
      %651 = vmatpush1.msra.mxu0 0.0
      %652 = vmatprep.subr.mxu0 0.0
      %653 = vmatpush1.msra.mxu0 0.0
      %654 = vmatprep.subr.mxu0 0.0
      %655 = vmatpush1.msra.mxu0 0.0
      %656 = vmatprep.subr.mxu0 0.0
      %657 = vmatpush1.msra.mxu0 %v629
      %658 = vmatprep.subr.mxu0 0.0
      %659 = vmatpush1.msra.mxu0 %v620
      %660 = vmatprep.subr.mxu0 0.0
      %661 = vmatpush1.msra.mxu0 %v613
      %662 = vmatprep.subr.mxu0 0.0
      %663 = vmatpush1.msra.mxu0 %v604
      %664 = vmatprep.subr.mxu0 0.0
      %665 = vmatpush1.msra.mxu0 %v595
      %666 = vmatprep.subr.mxu0 0.0
      %667 = vmatpush1.msra.mxu0 %v588
      %668 = vmatprep.subr.mxu0 0.0
      %669 = vmatpush1.msra.mxu0 %v579
      %670 = vmatprep.subr.mxu0 0.0
      %671 = vmatpush1.msra.mxu0 %v570
      %672 = vmatprep.subr.mxu0 0.0
      %673 = vmatpush1.msra.mxu0 %v535
      %674 = vmatprep.subr.mxu0 0.0
      %675 = vmatpush2.msra.mxu0 0.0
      %676 = vmatprep.subr.mxu0 0.0
      %677 = vmatpush2.msra.mxu0 0.0
      %678 = vmatprep.subr.mxu0 0.0
      %679 = vmatpush2.msra.mxu0 0.0
      %680 = vmatprep.subr.mxu0 0.0
      %681 = vmatpush2.msra.mxu0 0.0
      %682 = vmatprep.subr.mxu0 0.0
      %683 = vmatpush2.msra.mxu0 0.0
      %684 = vmatprep.subr.mxu0 0.0
      %685 = vmatpush2.msra.mxu0 0.0
      %686 = vmatprep.subr.mxu0 0.0
      %687 = vmatpush2.msra.mxu0 0.0
      %688 = vmatprep.subr.mxu0 0.0
      %689 = vmatpush2.msra.mxu0 0.0
      %690 = vmatprep.subr.mxu0 0.0
      %691 = vmatpush2.msra.mxu0 0.0
      %692 = vmatprep.subr.mxu0 0.0
      %693 = vmatpush2.msra.mxu0 0.0
      %694 = vmatprep.subr.mxu0 0.0
      %695 = vmatpush2.msra.mxu0 0.0
      %696 = vmatprep.subr.mxu0 0.0
      %697 = vmatpush2.msra.mxu0 0.0
      %698 = vmatprep.subr.mxu0 0.0
      %699 = vmatpush2.msra.mxu0 0.0
      %700 = vmatprep.subr.mxu0 0.0
      %701 = vmatpush2.msra.mxu0 0.0
      %702 = vmatprep.subr.mxu0 0.0
      %703 = vmatpush2.msra.mxu0 0.0
      %704 = vmatprep.subr.mxu0 0.0
      %705 = vmatpush2.msra.mxu0 0.0
      %706 = vmatprep.mubr.f32.mxu0 0.0
      %707 = vmatmul.mubr.f32.gmra.mxu0 %v640
      %v708 = vpop.f32.mrf.mxu0
      %v709 = vadd.f32 %v636, %v708
      %v710 = vpop.f32.mrf.mxu0
      %711 = vdwg.mxu0
      %712 = vst [vmem:[%s453] sm:$0xff] %v709
      %713 = vadd.xlane.f32.xlu0 %v709
      %v714 = vpop.xlane.xlu0 %713
      %v715 = vmul.f32 %v709, %v709
      %716 = vadd.xlane.f32.xlu0 %v715
      %v717 = vpop.xlane.xlu0 %716
      %v718 = vsel %vm508, %v714, %v717
      %vm719 = vcmask 15360
      %720 = vst.msk [vmem:[%s461] sm:$0xff] %vm719, %v718
      %p721 = scmp.lt.s32.totalorder %s24, 1
      %s722 = scalar_select %p721, %s24, 1
      %p723 = scmp.lt.s32.totalorder %s25, 1
      %s724 = scalar_select %p723, %s25, 1
      %s725 = smul.addr %s722, 2
      %s726 = sadd.s32 %s724, %s725
      %s727 = smul.addr %s726, 8
      %s728 = scalar_lea.vmem %s7, %s727
      %p729 = scmp.lt.s32.totalorder %s24, 1
      %s730 = scalar_select %p729, %s24, 1
      %p731 = scmp.lt.s32.totalorder %s25, 1
      %s732 = scalar_select %p731, %s25, 1
      %s733 = smul.addr %s730, 2
      %s734 = sadd.s32 %s732, %s733
      %s735 = smul.addr %s734, 8
      %s736 = scalar_lea.vmem %s8, %s735
      // Predicated region
      $region49: #{double_conv.4} parent=47 // pred_check
        %p737 = pneg %p232
      $region50: #{double_conv.4} parent=47 // pred_check_branch
        %739 = sbr.rel (%p737) target = $region52
      $region51: #{double_conv.4} parent=47 // pred_region
        _
      $region52: #{double_conv.4} parent=47 // pred_fallthru
        _
      // Predicated region
      $region53: #{double_conv.4} parent=47 // pred_check
        %p740 = pneg %p260
      $region54: #{double_conv.4} parent=47 // pred_check_branch
        %742 = sbr.rel (%p740) target = $region56
      $region55: #{double_conv.4} parent=47 // pred_region
        _
      $region56: #{double_conv.4} parent=47 // pred_fallthru
        _
    $region48: #{double_conv.4} parent=5 // pred_fallthru
      _
    %p743 = scmp.le.s32.totalorder 2, %s15
    // Predicated region
    $region57: #{double_conv.4} parent=5 // pred_check
      %p744 = pneg %p743
    $region58: #{double_conv.4} parent=5 // pred_check_branch
      %746 = sbr.rel (%p744) target = $region60
    $region59: #{double_conv.4} parent=5 // pred_region
      %s747 = ssub.s32 %s15, 2
      // Predicated region
      $region61: #{double_conv.4} parent=59 // pred_check
        %p748 = pneg %p238
      $region62: #{double_conv.4} parent=59 // pred_check_branch
        %750 = sbr.rel (%p748) target = $region64
      $region63: #{double_conv.4} parent=59 // pred_region
        %p751 = scmp.lt.s32.totalorder %s26, 1
        %s752 = scalar_select %p751, %s26, 1
        %p753 = scmp.lt.s32.totalorder %s27, 1
        %s754 = scalar_select %p753, %s27, 1
        %s755 = smul.addr %s752, 2
        %s756 = sadd.s32 %s754, %s755
        %s757 = smul.addr %s756, 8
        %s758 = scalar_lea.vmem %s7, %s757
      $region64: #{double_conv.4} parent=59 // pred_fallthru
        _
      // Predicated region
      $region65: #{double_conv.4} parent=59 // pred_check
        %p759 = pneg %p266
      $region66: #{double_conv.4} parent=59 // pred_check_branch
        %761 = sbr.rel (%p759) target = $region68
      $region67: #{double_conv.4} parent=59 // pred_region
        %p762 = scmp.lt.s32.totalorder %s26, 1
        %s763 = scalar_select %p762, %s26, 1
        %p764 = scmp.lt.s32.totalorder %s27, 1
        %s765 = scalar_select %p764, %s27, 1
        %s766 = smul.addr %s763, 2
        %s767 = sadd.s32 %s765, %s766
        %s768 = smul.addr %s767, 8
        %s769 = scalar_lea.vmem %s8, %s768
      $region68: #{double_conv.4} parent=59 // pred_fallthru
        _
    $region60: #{double_conv.4} parent=5 // pred_fallthru
      _
  $region6: #{double_conv.4} parent=0 // loop_footer
    %s19 = sadd.s32 1, %s15
  $region7: #{double_conv.4} parent=0 // loop_footer_branch
    %14 = sbr.rel target = $region3
  $region8: #{double_conv.4} parent=0 // loop_exit
    _

</llo_original>
